<compile_context>
chip_gen: v6e
topology: v6e:2x2x1
jax: 0.10.0
libtpu: 0.0.40
codegen_flags: <defaults>
</compile_context>

<pallas_src>
import functools

import jax
import jax.numpy as jnp
from jax import lax
from jax.experimental import pallas as pl
from jax.experimental.pallas import tpu as pltpu


def _round_up(x, m):
    return (x + m - 1) // m * m


_VMEM_LIMIT = 32 * 1024 * 1024      # fits v5e/v6e/v7x scoped VMEM comfortably
_K_TILE_THRESHOLD = 1024            # tile the contraction axis above this
_K_TILE = 512


# -----------------------------------------------------------------------------
# Pass 1: conv matmul (bf16 inputs, f32 VMEM accumulator on the MXU, K tiled
# via the innermost "arbitrary" grid axis) + per-(M-tile, channel) sum and
# sum-of-squares partials emitted at the last K step. Conv intermediate is
# stored in bf16; stats are computed from the exact f32 accumulator.
# -----------------------------------------------------------------------------
def _conv_stats_kernel(p_ref, w_ref, conv_ref, part_ref, acc_ref):
    kk = pl.program_id(2)

    @pl.when(kk == 0)
    def _():
        acc_ref[...] = jnp.zeros_like(acc_ref)

    acc_ref[...] += jnp.dot(p_ref[...], w_ref[...],
                            preferred_element_type=jnp.float32)

    @pl.when(kk == pl.num_programs(2) - 1)
    def _():
        conv = acc_ref[...]                                   # (tm, tn) f32
        conv_ref[...] = conv.astype(conv_ref.dtype)           # bf16 intermediate
        s = jnp.sum(conv, axis=0, keepdims=True)              # (1, tn) f32
        sq = jnp.sum(conv * conv, axis=0, keepdims=True)      # (1, tn) f32
        part_ref[...] = jnp.concatenate([s, sq], axis=0)[None]   # (1, 2, tn)


# -----------------------------------------------------------------------------
# Pass 2: out = conv * scale + shift (+ residual) (+ ReLU). Lane-dense,
# bf16 in / bf16 out, f32 math.
# -----------------------------------------------------------------------------
def _bn_relu_kernel(*refs, relu, has_res):
    if has_res:
        conv_ref, scale_ref, shift_ref, res_ref, o_ref = refs
    else:
        conv_ref, scale_ref, shift_ref, o_ref = refs
        res_ref = None
    out = conv_ref[...].astype(jnp.float32) * scale_ref[...] + shift_ref[...]
    if res_ref is not None:
        out = out + res_ref[...].astype(jnp.float32)
    if relu:
        out = jnp.maximum(out, 0.0)
    o_ref[...] = out.astype(o_ref.dtype)


def _im2col_nhwc(x, kh, kw, stride, padding):
    """x: (N,H,W,C) NHWC -> patches (N*Ho*Wo, KH*KW*C), column order (kh,kw,c).

    Built directly in NHWC order (no transpose scramble). 1x1 convs degrade to
    a pure reshape (no data blowup)."""
    n, h, w, c = x.shape
    ho = (h + 2 * padding - kh) // stride + 1
    wo = (w + 2 * padding - kw) // stride + 1
    if padding:
        x = jnp.pad(x, ((0, 0), (padding, padding), (padding, padding), (0, 0)))
    taps = []
    for ih in range(kh):
        for iw in range(kw):
            taps.append(x[:, ih:ih + stride * (ho - 1) + 1:stride,
                          iw:iw + stride * (wo - 1) + 1:stride, :])
    patches = taps[0] if len(taps) == 1 else jnp.concatenate(taps, axis=-1)
    return patches.reshape(n * ho * wo, kh * kw * c), ho, wo


def _prepare_convbn(p):
    """Hoisted, once-per-parameter preparation: weight OIHW -> (Kpad, Coutp)
    bf16 (zero-padded), gamma/beta padded to Coutp, plus tiling metadata."""
    w = p["w"]
    cout, cin, kh, kw = w.shape
    k = kh * kw * cin
    coutp = _round_up(cout, 128)
    tn = 256 if coutp % 256 == 0 else 128       # 256-wide MXU on v6e/v7x
    if k > _K_TILE_THRESHOLD:
        tk = _K_TILE
        kpad = _round_up(k, tk)
    else:
        tk = k
        kpad = k
    w2 = w.transpose(2, 3, 1, 0).reshape(k, cout)
    w2 = jnp.pad(w2, ((0, kpad - k), (0, coutp - cout))).astype(jnp.bfloat16)
    gamma_p = jnp.pad(p["gamma"].astype(jnp.float32), (0, coutp - cout))
    beta_p = jnp.pad(p["beta"].astype(jnp.float32), (0, coutp - cout))
    return {"w2": w2, "gamma_p": gamma_p, "beta_p": beta_p,
            "cout": cout, "coutp": coutp, "kh": kh, "kw": kw,
            "k": k, "kpad": kpad, "tk": tk, "tn": tn}


def conv_bn_relu(x, prep, *, stride, padding, eps=1e-5, relu=True,
                 residual=None, tile_m=512):
    """Fused Conv2d(bias=False) + BatchNorm2d(train-mode stats)
    [+ residual add] [+ ReLU].

    x: (N, H, W, Cin) NHWC (any float dtype; cast to bf16 for the MXU).
    prep: output of _prepare_convbn.  residual: optional NHWC array matching
    the conv output shape (added after BN, before ReLU).
    Returns NHWC (N, Ho, Wo, Cout) bfloat16.
    """
    n = x.shape[0]
    kh, kw = prep["kh"], prep["kw"]
    cout, coutp = prep["cout"], prep["coutp"]
    k, kpad, tk, tn = prep["k"], prep["kpad"], prep["tk"], prep["tn"]

    patches, ho, wo = _im2col_nhwc(x, kh, kw, stride, padding)
    m = patches.shape[0]

    # M tiling; zero-padded rows are harmless for the batch statistics
    # (they contribute nothing to sum/sumsq; we divide by the real M).
    if m <= tile_m:
        tm = _round_up(m, 16)                   # bf16 sublane-pack friendly
        mp = tm
    else:
        tm = tile_m
        mp = _round_up(m, tm)
    n_mtiles = mp // tm
    n_ctiles = coutp // tn
    n_ktiles = kpad // tk

    pad_m, pad_k = mp - m, kpad - k
    if pad_m or pad_k:
        patches = jnp.pad(patches, ((0, pad_m), (0, pad_k)))
    patches = patches.astype(jnp.bfloat16)
    w2 = prep["w2"]

    flops1 = 2 * mp * kpad * coutp
    bytes1 = (mp * kpad * 2 + n_mtiles * kpad * coutp * 2
              + mp * coutp * 2 + n_mtiles * 2 * coutp * 4)

    conv, partials = pl.pallas_call(
        _conv_stats_kernel,
        out_shape=(
            jax.ShapeDtypeStruct((mp, coutp), jnp.bfloat16),
            jax.ShapeDtypeStruct((n_mtiles, 2, coutp), jnp.float32),
        ),
        grid=(n_mtiles, n_ctiles, n_ktiles),
        in_specs=[
            pl.BlockSpec((tm, tk), lambda i, j, kk: (i, kk)),
            pl.BlockSpec((tk, tn), lambda i, j, kk: (kk, j)),
        ],
        out_specs=(
            pl.BlockSpec((tm, tn), lambda i, j, kk: (i, j)),
            pl.BlockSpec((1, 2, tn), lambda i, j, kk: (i, 0, j)),
        ),
        scratch_shapes=[pltpu.VMEM((tm, tn), jnp.float32)],
        compiler_params=pltpu.CompilerParams(
            dimension_semantics=("parallel", "parallel", "arbitrary"),
            vmem_limit_bytes=_VMEM_LIMIT),
        cost_estimate=pl.CostEstimate(flops=flops1, transcendentals=0,
                                      bytes_accessed=bytes1),
    )(patches, w2)

    # Exact batch statistics across all M tiles (tiny (n_mtiles, Coutp) reduce).
    # NOTE: E[x^2] - E[x]^2 in f32 — acceptable for BN-scale activations.
    csum = jnp.sum(partials[:, 0, :], axis=0)
    csumsq = jnp.sum(partials[:, 1, :], axis=0)
    mean = csum / m                                      # real M, not padded
    var = jnp.maximum(csumsq / m - mean * mean, 0.0)
    inv_std = lax.rsqrt(var + eps)
    scale = (prep["gamma_p"] * inv_std).reshape(1, coutp)
    shift = (prep["beta_p"] - mean * prep["gamma_p"] * inv_std).reshape(1, coutp)

    # Pass 2: pure streaming — use a larger M tile when the M tiling allows.
    tm2 = tm
    for f in (4, 2):
        if n_mtiles % f == 0 and tm * f <= 2048:
            tm2 = tm * f
            break
    n_mtiles2 = mp // tm2

    has_res = residual is not None
    ins = [conv, scale, shift]
    in_specs = [
        pl.BlockSpec((tm2, tn), lambda i, j: (i, j)),
        pl.BlockSpec((1, tn), lambda i, j: (0, j)),
        pl.BlockSpec((1, tn), lambda i, j: (0, j)),
    ]
    if has_res:
        res = residual.reshape(m, cout)
        if pad_m or coutp != cout:
            res = jnp.pad(res, ((0, pad_m), (0, coutp - cout)))
        ins.append(res.astype(jnp.bfloat16))
        in_specs.append(pl.BlockSpec((tm2, tn), lambda i, j: (i, j)))

    bytes2 = (2 + int(has_res)) * mp * coutp * 2 + 2 * coutp * 4
    out_flat = pl.pallas_call(
        functools.partial(_bn_relu_kernel, relu=relu, has_res=has_res),
        out_shape=jax.ShapeDtypeStruct((mp, coutp), jnp.bfloat16),
        grid=(n_mtiles2, n_ctiles),
        in_specs=in_specs,
        out_specs=pl.BlockSpec((tm2, tn), lambda i, j: (i, j)),
        compiler_params=pltpu.CompilerParams(
            dimension_semantics=("parallel", "parallel"),
            vmem_limit_bytes=_VMEM_LIMIT),
        cost_estimate=pl.CostEstimate(flops=3 * mp * coutp, transcendentals=0,
                                      bytes_accessed=bytes2),
    )(*ins)

    return out_flat[:m, :cout].reshape(n, ho, wo, cout)


# -----------------------------------------------------------------------------
# ResNet assembly (NHWC). conv_fn is either the Pallas path or the reference.
# -----------------------------------------------------------------------------
def _conv_bn_relu_pallas(p, x, *, stride, padding, relu, residual=None):
    return conv_bn_relu(x, p["prep"], stride=stride, padding=padding,
                        relu=relu, residual=residual)


def _conv_bn_relu_ref(p, x, *, stride, padding, relu, residual=None, eps=1e-5):
    conv = lax.conv_general_dilated(
        x, p["w"], window_strides=(stride, stride),
        padding=[(padding, padding), (padding, padding)],
        dimension_numbers=("NHWC", "OIHW", "NHWC"))
    mean = jnp.mean(conv, axis=(0, 1, 2), keepdims=True)
    var = jnp.mean((conv - mean) ** 2, axis=(0, 1, 2), keepdims=True)
    out = (conv - mean) * lax.rsqrt(var + eps)
    out = out * p["gamma"].reshape(1, 1, 1, -1) + p["beta"].reshape(1, 1, 1, -1)
    if residual is not None:
        out = out + residual
    if relu:
        out = jnp.maximum(out, 0.0)
    return out


def _init_convbn(key, cin, cout, k):
    fan_in = cin * k * k
    w = jax.random.normal(key, (cout, cin, k, k), jnp.float32) * jnp.sqrt(2.0 / fan_in)
    p = {"w": w, "gamma": jnp.ones((cout,), jnp.float32),
         "beta": jnp.zeros((cout,), jnp.float32)}
    p["prep"] = _prepare_convbn(p)      # hoisted weight transform (perf item)
    return p


def _init_bottleneck(key, cin, mid, downsample):
    out_c = 4 * mid
    ks = jax.random.split(key, 4)
    p = {"in": _init_convbn(ks[0], cin, mid, 1),
         "mid": _init_convbn(ks[1], mid, mid, 3),
         "out": _init_convbn(ks[2], mid, out_c, 1),
         "downsample": downsample, "skip": None, "skip_stride": 1}
    if downsample:
        p["skip"] = _init_convbn(ks[3], cin, out_c, 1)
        p["skip_stride"] = 2
    elif cin != out_c:
        p["skip"] = _init_convbn(ks[3], cin, out_c, 1)
    return p, out_c


def _init_resnet(key, module_sizes, module_channels, num_classes):
    keys = jax.random.split(key, 4 + sum(module_sizes))
    c0 = module_channels[0]
    stem = [(_init_convbn(keys[0], 3, c0 // 2, 3), 2, 1),
            (_init_convbn(keys[1], c0 // 2, c0 // 2, 3), 1, 1),
            (_init_convbn(keys[2], c0 // 2, c0, 3), 1, 1)]
    blocks, out_c, bi = [], c0, 3
    for mi, (n_layers, mid) in enumerate(zip(module_sizes, module_channels)):
        for i in range(n_layers):
            bp, out_c = _init_bottleneck(keys[bi], out_c, mid, i == 0 and mi > 0)
            blocks.append(bp)
            bi += 1
    fc_w = jax.random.normal(keys[bi], (num_classes, out_c), jnp.float32) * jnp.sqrt(2.0 / out_c)
    fc_b = jnp.zeros((num_classes,), jnp.float32)
    return {"stem": stem, "blocks": blocks, "fc_w": fc_w, "fc_b": fc_b}


def _apply_bottleneck(p, x, conv_fn):
    if p["skip"] is not None:
        residual = conv_fn(p["skip"], x, stride=p["skip_stride"], padding=0, relu=False)
    else:
        residual = x
    out = conv_fn(p["in"], x, stride=1, padding=0, relu=True)
    out = conv_fn(p["mid"], out, stride=2 if p["downsample"] else 1, padding=1, relu=True)
    # Residual add + final ReLU fused into pass 2 of the 'out' conv.
    return conv_fn(p["out"], out, stride=1, padding=0, relu=True, residual=residual)


def _apply_resnet(params, x, conv_fn):
    """x: NHWC. Returns (N, num_classes) float32 logits."""
    for p, stride, padding in params["stem"]:
        x = conv_fn(p, x, stride=stride, padding=padding, relu=True)
    # MaxPool2d(kernel_size=3, stride=2, padding=1) — plain-JAX glue.
    neg_inf = jnp.array(-jnp.inf, dtype=x.dtype)
    x = lax.reduce_window(x, neg_inf, lax.max, (1, 3, 3, 1), (1, 2, 2, 1),
                          [(0, 0), (1, 1), (1, 1), (0, 0)])
    for bp in params["blocks"]:
        x = _apply_bottleneck(bp, x, conv_fn)
    x = jnp.mean(x, axis=(1, 2)).astype(jnp.float32)   # AdaptiveAvgPool2d((1,1))
    return x @ params["fc_w"].T + params["fc_b"]       # nn.Linear


if __name__ == "__main__":
    root = jax.random.PRNGKey(0)
    k_l1, k_l2, k_model, k_x1, k_x2, k_x3 = jax.random.split(root, 6)

    # (1) Fused ConvBNRelu(4 -> 8, 3x3, stride 1, pad 1) vs reference.
    x1 = jax.random.normal(k_x1, (2, 16, 16, 4), jnp.float32)         # NHWC
    p1 = _init_convbn(k_l1, 4, 8, 3)
    out1 = jax.block_until_ready(
        _conv_bn_relu_pallas(p1, x1, stride=1, padding=1, relu=True))
    ref1 = _conv_bn_relu_ref(p1, x1, stride=1, padding=1, relu=True)
    assert out1.shape == (2, 16, 16, 8), out1.shape
    err1 = float(jnp.max(jnp.abs(out1.astype(jnp.float32) - ref1)))
    assert err1 < 2e-1, err1          # bf16 MXU inputs/outputs -> relaxed tol

    # (2) Large-K layer exercising the K-tiled reduction path (K = 1152 > 1024).
    x3 = jax.random.normal(k_x3, (2, 8, 8, 128), jnp.float32)         # NHWC
    p3 = _init_convbn(k_l2, 128, 128, 3)
    out3 = jax.block_until_ready(
        _conv_bn_relu_pallas(p3, x3, stride=1, padding=1, relu=True))
    ref3 = _conv_bn_relu_ref(p3, x3, stride=1, padding=1, relu=True)
    assert out3.shape == (2, 8, 8, 128), out3.shape
    err3 = float(jnp.max(jnp.abs(out3.astype(jnp.float32) - ref3)))
    assert err3 < 2e-1, err3

    # (3) Tiny ResNet forward (inception stem + 1 bottleneck module + fc).
    params = _init_resnet(k_model, module_sizes=(1,), module_channels=(8,),
                          num_classes=10)
    x = jax.random.normal(k_x2, (2, 16, 16, 3), jnp.float32)          # NHWC
    logits = jax.block_until_ready(_apply_resnet(params, x, _conv_bn_relu_pallas))
    logits_ref = _apply_resnet(params, x, _conv_bn_relu_ref)
    assert logits.shape == (2, 10), logits.shape
    err = float(jnp.max(jnp.abs(logits - logits_ref)))
    assert err < 5e-1, err            # bf16 error accumulated over 7 fused layers

    print("KERNEL_OK")
</pallas_src>

<mosaic_0001>
module attributes {stable_mosaic.version = 11 : i64} {
  func.func @_conv_stats_kernel(%arg0: i32, %arg1: i32, %arg2: i32, %arg3: memref<512x36xbf16, #tpu.memory_space<vmem>>, %arg4: memref<36x128xbf16, #tpu.memory_space<vmem>>, %arg5: memref<512x128xbf16, #tpu.memory_space<vmem>>, %arg6: memref<1x2x128xf32, #tpu.memory_space<vmem>>, %arg7: memref<512x128xf32, #tpu.memory_space<vmem>>) attributes {dimension_semantics = [#tpu.dimension_semantics<parallel>, #tpu.dimension_semantics<parallel>, #tpu.dimension_semantics<arbitrary>], iteration_bounds = array<i64: 1, 1, 1>, scalar_prefetch = 0 : i64, scratch_operands = 1 : i64, tpu.core_type = #tpu.core_type<tc>, window_params = [{transform_indices = @transform_0, window_bounds = array<i64: 512, 36>}, {transform_indices = @transform_1, window_bounds = array<i64: 36, 128>}, {transform_indices = @transform_2, window_bounds = array<i64: 512, 128>}, {transform_indices = @transform_3, window_bounds = array<i64: 1, 2, 128>}]} {
    %c0_i32 = arith.constant 0 : i32
    %0 = arith.cmpi eq, %arg2, %c0_i32 : i32
    %1 = arith.extui %0 : i1 to i32
    %c0_i32_0 = arith.constant 0 : i32
    %2 = arith.cmpi ne, %1, %c0_i32_0 : i32
    scf.if %2 {
      %cst_10 = arith.constant 0.000000e+00 : f32
      %12 = vector.broadcast %cst_10 : f32 to vector<512x128xf32>
      %c0_11 = arith.constant 0 : index
      %c0_12 = arith.constant 0 : index
      %13 = vector.load %arg7[%c0_11, %c0_12] : memref<512x128xf32, #tpu.memory_space<vmem>>, vector<512x128xf32>
      tpu.vector_store %arg7[%c0_11, %c0_12], %12 {strides = array<i32>} : memref<512x128xf32, #tpu.memory_space<vmem>>, vector<512x128xf32>,
    } else {
    }
    %c0 = arith.constant 0 : index
    %c0_1 = arith.constant 0 : index
    %3 = vector.load %arg7[%c0, %c0_1] : memref<512x128xf32, #tpu.memory_space<vmem>>, vector<512x128xf32>
    %c0_2 = arith.constant 0 : index
    %c0_3 = arith.constant 0 : index
    %4 = vector.load %arg3[%c0_2, %c0_3] : memref<512x36xbf16, #tpu.memory_space<vmem>>, vector<512x36xbf16>
    %c0_4 = arith.constant 0 : index
    %c0_5 = arith.constant 0 : index
    %5 = vector.load %arg4[%c0_4, %c0_5] : memref<36x128xbf16, #tpu.memory_space<vmem>>, vector<36x128xbf16>
    %cst = arith.constant dense<0.000000e+00> : vector<512x128xf32>
    %6 = tpu.matmul %4, %5, %cst {dimension_numbers = #tpu.dot_dimension_numbers<[1], [0], [0], [1], [0, 0, 1, 1], [], []>} : vector<512x36xbf16>, vector<36x128xbf16>, vector<512x128xf32> -> vector<512x128xf32>
    %7 = arith.addf %3, %6 : vector<512x128xf32>
    %c0_6 = arith.constant 0 : index
    %c0_7 = arith.constant 0 : index
    %8 = vector.load %arg7[%c0_6, %c0_7] : memref<512x128xf32, #tpu.memory_space<vmem>>, vector<512x128xf32>
    tpu.vector_store %arg7[%c0_6, %c0_7], %7 {strides = array<i32>} : memref<512x128xf32, #tpu.memory_space<vmem>>, vector<512x128xf32>,
    %c0_i32_8 = arith.constant 0 : i32
    %9 = arith.cmpi eq, %arg2, %c0_i32_8 : i32
    %10 = arith.extui %9 : i1 to i32
    %c0_i32_9 = arith.constant 0 : i32
    %11 = arith.cmpi ne, %10, %c0_i32_9 : i32
    scf.if %11 {
      %c0_10 = arith.constant 0 : index
      %c0_11 = arith.constant 0 : index
      %12 = vector.load %arg7[%c0_10, %c0_11] : memref<512x128xf32, #tpu.memory_space<vmem>>, vector<512x128xf32>
      %13 = arith.truncf %12 : vector<512x128xf32> to vector<512x128xbf16>
      %c0_12 = arith.constant 0 : index
      %c0_13 = arith.constant 0 : index
      %14 = vector.load %arg5[%c0_12, %c0_13] : memref<512x128xbf16, #tpu.memory_space<vmem>>, vector<512x128xbf16>
      tpu.vector_store %arg5[%c0_12, %c0_13], %13 {strides = array<i32>} : memref<512x128xbf16, #tpu.memory_space<vmem>>, vector<512x128xbf16>,
      %cst_14 = arith.constant dense<0.000000e+00> : vector<128xf32>
      %15 = vector.multi_reduction <add>, %12, %cst_14 [0] : vector<512x128xf32> to vector<128xf32>
      %16 = vector.shape_cast %15 : vector<128xf32> to vector<1x128xf32>
      %17 = arith.mulf %12, %12 : vector<512x128xf32>
      %cst_15 = arith.constant dense<0.000000e+00> : vector<128xf32>
      %18 = vector.multi_reduction <add>, %17, %cst_15 [0] : vector<512x128xf32> to vector<128xf32>
      %19 = vector.shape_cast %18 : vector<128xf32> to vector<1x128xf32>
      %20 = tpu.concatenate %16, %19 in 0 : vector<1x128xf32>, vector<1x128xf32> -> vector<2x128xf32>
      %21 = vector.shape_cast %20 : vector<2x128xf32> to vector<1x2x128xf32>
      %c0_16 = arith.constant 0 : index
      %c0_17 = arith.constant 0 : index
      %c0_18 = arith.constant 0 : index
      %22 = vector.load %arg6[%c0_16, %c0_17, %c0_18] : memref<1x2x128xf32, #tpu.memory_space<vmem>>, vector<1x2x128xf32>
      tpu.vector_store %arg6[%c0_16, %c0_17, %c0_18], %21 {strides = array<i32>} : memref<1x2x128xf32, #tpu.memory_space<vmem>>, vector<1x2x128xf32>,
    } else {
    }
    return
  }
  func.func @transform_0(%arg0: i32, %arg1: i32, %arg2: i32) -> (i32, i32) {
    %c0_i32 = arith.constant 0 : i32
    return %arg0, %arg2 : i32, i32
  }
  func.func @transform_1(%arg0: i32, %arg1: i32, %arg2: i32) -> (i32, i32) {
    %c0_i32 = arith.constant 0 : i32
    return %arg2, %arg1 : i32, i32
  }
  func.func @transform_2(%arg0: i32, %arg1: i32, %arg2: i32) -> (i32, i32) {
    %c0_i32 = arith.constant 0 : i32
    return %arg0, %arg1 : i32, i32
  }
  func.func @transform_3(%arg0: i32, %arg1: i32, %arg2: i32) -> (i32, i32, i32) {
    %c0_i32 = arith.constant 0 : i32
    %c0_i32_0 = arith.constant 0 : i32
    return %arg0, %c0_i32, %arg1 : i32, i32, i32
  }
}

</mosaic_0001>

<llo_original>
// kernel: tpu_custom_call.1
$region0: #{tpu_custom_call.1}
  #allocation0 [shape = 'u32[]', space=smem, size = 0x4, offset = 0x4, fixed_abs, tag = 'smem constant byte address 0x4 - core index']
  #allocation1 [shape = 'u32[144,128]{1,0:T(1,128)}', space=vmem, size = 0x12000, scoped, tag = 'internal scratch']
  #allocation2 [shape = 'f32[512,128]{1,0:T(8,128)}', space=vmem, size = 0x40000, scoped, tag = 'scratch operand']
  %s0 = inlined_call_operand.vmem [shape: bf16[512,36], index: 0, kind: input, shape index: {}]
  %s1 = inlined_call_operand.vmem [shape: bf16[36,128], index: 1, kind: input, shape index: {}]
  %s2 = inlined_call_operand.hbm [shape: bf16[512,128], index: 2, kind: output, shape index: {0}]
  %s3 = inlined_call_operand.hbm [shape: f32[1,2,128], index: 3, kind: output, shape index: {1}]
  %4 = xla_tuple %s2, %s3
  %s5 = sld [smem:[#allocation0]]
  $region34: #{tpu_custom_call.1} parent=0
    _
  %s7 = ssub.s32 1, %s5
  %s8 = scalar_select 0, %s7, %s5
  $region1: #{tpu_custom_call.1} parent=0
    #allocation3 [shape = 'u8[131072]{0}', space=vmem, size = 0x20000, scoped, tag = 'output window, operand 0, single buffered']
    #allocation4 [shape = 's32[1]{0}', space=sflag, size = 0x4, scoped, tag = 'scoped memory for tpu_custom_call.1']
    #allocation5 [shape = 'u8[1024]{0}', space=vmem, size = 0x400, scoped, tag = 'output window, operand 1, single buffered']
    #allocation6 [shape = 's32[1]{0}', space=sflag, size = 0x4, scoped, tag = 'scoped memory for tpu_custom_call.1']
    %9 = vsyncpa [#allocation4], 0
    %10 = vsyncpa [#allocation6], 0
    // Predicated region
    $region2: #{tpu_custom_call.1} parent=1 // pred_check
      _
    $region3: #{tpu_custom_call.1} parent=1 // pred_check_branch
      %12 = sbr.rel (0) target = $region5
    $region4: #{tpu_custom_call.1} parent=1 // pred_region
      _
    $region5: #{tpu_custom_call.1} parent=1 // pred_fallthru
      _
    // Predicated region
    $region6: #{tpu_custom_call.1} parent=1 // pred_check
      _
    $region7: #{tpu_custom_call.1} parent=1 // pred_check_branch
      %14 = sbr.rel (0) target = $region9
    $region8: #{tpu_custom_call.1} parent=1 // pred_region
      _
    $region9: #{tpu_custom_call.1} parent=1 // pred_fallthru
      _
    %p16 = scmp.eq.s32.totalorder 0, 0
    // Predicated region
    $region10: #{tpu_custom_call.1} parent=1 // pred_check
      %p17 = pneg %p16
    $region11: #{tpu_custom_call.1} parent=1 // pred_check_branch
      %19 = sbr.rel (%p17) target = $region13
    $region12: #{tpu_custom_call.1} parent=1 // pred_region
      %20 = vst [vmem:[#allocation2] sm:$0xff] 0.0
      %21 = vst [vmem:[#allocation2 + $0x8] sm:$0xff] 0.0
      %22 = vst [vmem:[#allocation2 + $0x10] sm:$0xff] 0.0
      %23 = vst [vmem:[#allocation2 + $0x18] sm:$0xff] 0.0
      %24 = vst [vmem:[#allocation2 + $0x20] sm:$0xff] 0.0
      %25 = vst [vmem:[#allocation2 + $0x28] sm:$0xff] 0.0
      %26 = vst [vmem:[#allocation2 + $0x30] sm:$0xff] 0.0
      %27 = vst [vmem:[#allocation2 + $0x38] sm:$0xff] 0.0
      %28 = vst [vmem:[#allocation2 + $0x40] sm:$0xff] 0.0
      %29 = vst [vmem:[#allocation2 + $0x48] sm:$0xff] 0.0
      %30 = vst [vmem:[#allocation2 + $0x50] sm:$0xff] 0.0
      %31 = vst [vmem:[#allocation2 + $0x58] sm:$0xff] 0.0
      %32 = vst [vmem:[#allocation2 + $0x60] sm:$0xff] 0.0
      %33 = vst [vmem:[#allocation2 + $0x68] sm:$0xff] 0.0
      %34 = vst [vmem:[#allocation2 + $0x70] sm:$0xff] 0.0
      %35 = vst [vmem:[#allocation2 + $0x78] sm:$0xff] 0.0
      %36 = vst [vmem:[#allocation2 + $0x80] sm:$0xff] 0.0
      %37 = vst [vmem:[#allocation2 + $0x88] sm:$0xff] 0.0
      %38 = vst [vmem:[#allocation2 + $0x90] sm:$0xff] 0.0
      %39 = vst [vmem:[#allocation2 + $0x98] sm:$0xff] 0.0
      %40 = vst [vmem:[#allocation2 + $0xa0] sm:$0xff] 0.0
      %41 = vst [vmem:[#allocation2 + $0xa8] sm:$0xff] 0.0
      %42 = vst [vmem:[#allocation2 + $0xb0] sm:$0xff] 0.0
      %43 = vst [vmem:[#allocation2 + $0xb8] sm:$0xff] 0.0
      %44 = vst [vmem:[#allocation2 + $0xc0] sm:$0xff] 0.0
      %45 = vst [vmem:[#allocation2 + $0xc8] sm:$0xff] 0.0
      %46 = vst [vmem:[#allocation2 + $0xd0] sm:$0xff] 0.0
      %47 = vst [vmem:[#allocation2 + $0xd8] sm:$0xff] 0.0
      %48 = vst [vmem:[#allocation2 + $0xe0] sm:$0xff] 0.0
      %49 = vst [vmem:[#allocation2 + $0xe8] sm:$0xff] 0.0
      %50 = vst [vmem:[#allocation2 + $0xf0] sm:$0xff] 0.0
      %51 = vst [vmem:[#allocation2 + $0xf8] sm:$0xff] 0.0
      %52 = vst [vmem:[#allocation2 + $0x100] sm:$0xff] 0.0
      %53 = vst [vmem:[#allocation2 + $0x108] sm:$0xff] 0.0
      %54 = vst [vmem:[#allocation2 + $0x110] sm:$0xff] 0.0
      %55 = vst [vmem:[#allocation2 + $0x118] sm:$0xff] 0.0
      %56 = vst [vmem:[#allocation2 + $0x120] sm:$0xff] 0.0
      %57 = vst [vmem:[#allocation2 + $0x128] sm:$0xff] 0.0
      %58 = vst [vmem:[#allocation2 + $0x130] sm:$0xff] 0.0
      %59 = vst [vmem:[#allocation2 + $0x138] sm:$0xff] 0.0
      %60 = vst [vmem:[#allocation2 + $0x140] sm:$0xff] 0.0
      %61 = vst [vmem:[#allocation2 + $0x148] sm:$0xff] 0.0
      %62 = vst [vmem:[#allocation2 + $0x150] sm:$0xff] 0.0
      %63 = vst [vmem:[#allocation2 + $0x158] sm:$0xff] 0.0
      %64 = vst [vmem:[#allocation2 + $0x160] sm:$0xff] 0.0
      %65 = vst [vmem:[#allocation2 + $0x168] sm:$0xff] 0.0
      %66 = vst [vmem:[#allocation2 + $0x170] sm:$0xff] 0.0
      %67 = vst [vmem:[#allocation2 + $0x178] sm:$0xff] 0.0
      %68 = vst [vmem:[#allocation2 + $0x180] sm:$0xff] 0.0
      %69 = vst [vmem:[#allocation2 + $0x188] sm:$0xff] 0.0
      %70 = vst [vmem:[#allocation2 + $0x190] sm:$0xff] 0.0
      %71 = vst [vmem:[#allocation2 + $0x198] sm:$0xff] 0.0
      %72 = vst [vmem:[#allocation2 + $0x1a0] sm:$0xff] 0.0
      %73 = vst [vmem:[#allocation2 + $0x1a8] sm:$0xff] 0.0
      %74 = vst [vmem:[#allocation2 + $0x1b0] sm:$0xff] 0.0
      %75 = vst [vmem:[#allocation2 + $0x1b8] sm:$0xff] 0.0
      %76 = vst [vmem:[#allocation2 + $0x1c0] sm:$0xff] 0.0
      %77 = vst [vmem:[#allocation2 + $0x1c8] sm:$0xff] 0.0
      %78 = vst [vmem:[#allocation2 + $0x1d0] sm:$0xff] 0.0
      %79 = vst [vmem:[#allocation2 + $0x1d8] sm:$0xff] 0.0
      %80 = vst [vmem:[#allocation2 + $0x1e0] sm:$0xff] 0.0
      %81 = vst [vmem:[#allocation2 + $0x1e8] sm:$0xff] 0.0
      %82 = vst [vmem:[#allocation2 + $0x1f0] sm:$0xff] 0.0
      %83 = vst [vmem:[#allocation2 + $0x1f8] sm:$0xff] 0.0
    $region13: #{tpu_custom_call.1} parent=1 // pred_fallthru
      _
    %v84 = vld [vmem:[#allocation2] sm:$0xff]
    %v85 = vld [vmem:[#allocation2 + $0x8] sm:$0xff]
    %v86 = vld [vmem:[#allocation2 + $0x10] sm:$0xff]
    %v87 = vld [vmem:[#allocation2 + $0x18] sm:$0xff]
    %v88 = vld [vmem:[#allocation2 + $0x20] sm:$0xff]
    %v89 = vld [vmem:[#allocation2 + $0x28] sm:$0xff]
    %v90 = vld [vmem:[#allocation2 + $0x30] sm:$0xff]
    %v91 = vld [vmem:[#allocation2 + $0x38] sm:$0xff]
    %v92 = vld [vmem:[#allocation2 + $0x40] sm:$0xff]
    %v93 = vld [vmem:[#allocation2 + $0x48] sm:$0xff]
    %v94 = vld [vmem:[#allocation2 + $0x50] sm:$0xff]
    %v95 = vld [vmem:[#allocation2 + $0x58] sm:$0xff]
    %v96 = vld [vmem:[#allocation2 + $0x60] sm:$0xff]
    %v97 = vld [vmem:[#allocation2 + $0x68] sm:$0xff]
    %v98 = vld [vmem:[#allocation2 + $0x70] sm:$0xff]
    %v99 = vld [vmem:[#allocation2 + $0x78] sm:$0xff]
    %v100 = vld [vmem:[#allocation2 + $0x80] sm:$0xff]
    %v101 = vld [vmem:[#allocation2 + $0x88] sm:$0xff]
    %v102 = vld [vmem:[#allocation2 + $0x90] sm:$0xff]
    %v103 = vld [vmem:[#allocation2 + $0x98] sm:$0xff]
    %v104 = vld [vmem:[#allocation2 + $0xa0] sm:$0xff]
    %v105 = vld [vmem:[#allocation2 + $0xa8] sm:$0xff]
    %v106 = vld [vmem:[#allocation2 + $0xb0] sm:$0xff]
    %v107 = vld [vmem:[#allocation2 + $0xb8] sm:$0xff]
    %v108 = vld [vmem:[#allocation2 + $0xc0] sm:$0xff]
    %v109 = vld [vmem:[#allocation2 + $0xc8] sm:$0xff]
    %v110 = vld [vmem:[#allocation2 + $0xd0] sm:$0xff]
    %v111 = vld [vmem:[#allocation2 + $0xd8] sm:$0xff]
    %v112 = vld [vmem:[#allocation2 + $0xe0] sm:$0xff]
    %v113 = vld [vmem:[#allocation2 + $0xe8] sm:$0xff]
    %v114 = vld [vmem:[#allocation2 + $0xf0] sm:$0xff]
    %v115 = vld [vmem:[#allocation2 + $0xf8] sm:$0xff]
    %v116 = vld [vmem:[#allocation2 + $0x100] sm:$0xff]
    %v117 = vld [vmem:[#allocation2 + $0x108] sm:$0xff]
    %v118 = vld [vmem:[#allocation2 + $0x110] sm:$0xff]
    %v119 = vld [vmem:[#allocation2 + $0x118] sm:$0xff]
    %v120 = vld [vmem:[#allocation2 + $0x120] sm:$0xff]
    %v121 = vld [vmem:[#allocation2 + $0x128] sm:$0xff]
    %v122 = vld [vmem:[#allocation2 + $0x130] sm:$0xff]
    %v123 = vld [vmem:[#allocation2 + $0x138] sm:$0xff]
    %v124 = vld [vmem:[#allocation2 + $0x140] sm:$0xff]
    %v125 = vld [vmem:[#allocation2 + $0x148] sm:$0xff]
    %v126 = vld [vmem:[#allocation2 + $0x150] sm:$0xff]
    %v127 = vld [vmem:[#allocation2 + $0x158] sm:$0xff]
    %v128 = vld [vmem:[#allocation2 + $0x160] sm:$0xff]
    %v129 = vld [vmem:[#allocation2 + $0x168] sm:$0xff]
    %v130 = vld [vmem:[#allocation2 + $0x170] sm:$0xff]
    %v131 = vld [vmem:[#allocation2 + $0x178] sm:$0xff]
    %v132 = vld [vmem:[#allocation2 + $0x180] sm:$0xff]
    %v133 = vld [vmem:[#allocation2 + $0x188] sm:$0xff]
    %v134 = vld [vmem:[#allocation2 + $0x190] sm:$0xff]
    %v135 = vld [vmem:[#allocation2 + $0x198] sm:$0xff]
    %v136 = vld [vmem:[#allocation2 + $0x1a0] sm:$0xff]
    %v137 = vld [vmem:[#allocation2 + $0x1a8] sm:$0xff]
    %v138 = vld [vmem:[#allocation2 + $0x1b0] sm:$0xff]
    %v139 = vld [vmem:[#allocation2 + $0x1b8] sm:$0xff]
    %v140 = vld [vmem:[#allocation2 + $0x1c0] sm:$0xff]
    %v141 = vld [vmem:[#allocation2 + $0x1c8] sm:$0xff]
    %v142 = vld [vmem:[#allocation2 + $0x1d0] sm:$0xff]
    %v143 = vld [vmem:[#allocation2 + $0x1d8] sm:$0xff]
    %v144 = vld [vmem:[#allocation2 + $0x1e0] sm:$0xff]
    %v145 = vld [vmem:[#allocation2 + $0x1e8] sm:$0xff]
    %v146 = vld [vmem:[#allocation2 + $0x1f0] sm:$0xff]
    %v147 = vld [vmem:[#allocation2 + $0x1f8] sm:$0xff]
    %v148 = vld [vmem:[%s0] sm:$0xf]
    %v149 = vld [vmem:[%s0 + $0x4] sm:$0xf]
    %v150 = vld [vmem:[%s0 + $0x8] sm:$0xf]
    %v151 = vld [vmem:[%s0 + $0xc] sm:$0xf]
    %v152 = vld [vmem:[%s0 + $0x10] sm:$0xf]
    %v153 = vld [vmem:[%s0 + $0x14] sm:$0xf]
    %v154 = vld [vmem:[%s0 + $0x18] sm:$0xf]
    %v155 = vld [vmem:[%s0 + $0x1c] sm:$0xf]
    %v156 = vld [vmem:[%s0 + $0x20] sm:$0xf]
    %v157 = vld [vmem:[%s0 + $0x24] sm:$0xf]
    %v158 = vld [vmem:[%s0 + $0x28] sm:$0xf]
    %v159 = vld [vmem:[%s0 + $0x2c] sm:$0xf]
    %v160 = vld [vmem:[%s0 + $0x30] sm:$0xf]
    %v161 = vld [vmem:[%s0 + $0x34] sm:$0xf]
    %v162 = vld [vmem:[%s0 + $0x38] sm:$0xf]
    %v163 = vld [vmem:[%s0 + $0x3c] sm:$0xf]
    %v164 = vld [vmem:[%s0 + $0x40] sm:$0xf]
    %v165 = vld [vmem:[%s0 + $0x44] sm:$0xf]
    %v166 = vld [vmem:[%s0 + $0x48] sm:$0xf]
    %v167 = vld [vmem:[%s0 + $0x4c] sm:$0xf]
    %v168 = vld [vmem:[%s0 + $0x50] sm:$0xf]
    %v169 = vld [vmem:[%s0 + $0x54] sm:$0xf]
    %v170 = vld [vmem:[%s0 + $0x58] sm:$0xf]
    %v171 = vld [vmem:[%s0 + $0x5c] sm:$0xf]
    %v172 = vld [vmem:[%s0 + $0x60] sm:$0xf]
    %v173 = vld [vmem:[%s0 + $0x64] sm:$0xf]
    %v174 = vld [vmem:[%s0 + $0x68] sm:$0xf]
    %v175 = vld [vmem:[%s0 + $0x6c] sm:$0xf]
    %v176 = vld [vmem:[%s0 + $0x70] sm:$0xf]
    %v177 = vld [vmem:[%s0 + $0x74] sm:$0xf]
    %v178 = vld [vmem:[%s0 + $0x78] sm:$0xf]
    %v179 = vld [vmem:[%s0 + $0x7c] sm:$0xf]
    %v180 = vld [vmem:[%s0 + $0x80] sm:$0xf]
    %v181 = vld [vmem:[%s0 + $0x84] sm:$0xf]
    %v182 = vld [vmem:[%s0 + $0x88] sm:$0xf]
    %v183 = vld [vmem:[%s0 + $0x8c] sm:$0xf]
    %v184 = vld [vmem:[%s0 + $0x90] sm:$0xf]
    %v185 = vld [vmem:[%s0 + $0x94] sm:$0xf]
    %v186 = vld [vmem:[%s0 + $0x98] sm:$0xf]
    %v187 = vld [vmem:[%s0 + $0x9c] sm:$0xf]
    %v188 = vld [vmem:[%s0 + $0xa0] sm:$0xf]
    %v189 = vld [vmem:[%s0 + $0xa4] sm:$0xf]
    %v190 = vld [vmem:[%s0 + $0xa8] sm:$0xf]
    %v191 = vld [vmem:[%s0 + $0xac] sm:$0xf]
    %v192 = vld [vmem:[%s0 + $0xb0] sm:$0xf]
    %v193 = vld [vmem:[%s0 + $0xb4] sm:$0xf]
    %v194 = vld [vmem:[%s0 + $0xb8] sm:$0xf]
    %v195 = vld [vmem:[%s0 + $0xbc] sm:$0xf]
    %v196 = vld [vmem:[%s0 + $0xc0] sm:$0xf]
    %v197 = vld [vmem:[%s0 + $0xc4] sm:$0xf]
    %v198 = vld [vmem:[%s0 + $0xc8] sm:$0xf]
    %v199 = vld [vmem:[%s0 + $0xcc] sm:$0xf]
    %v200 = vld [vmem:[%s0 + $0xd0] sm:$0xf]
    %v201 = vld [vmem:[%s0 + $0xd4] sm:$0xf]
    %v202 = vld [vmem:[%s0 + $0xd8] sm:$0xf]
    %v203 = vld [vmem:[%s0 + $0xdc] sm:$0xf]
    %v204 = vld [vmem:[%s0 + $0xe0] sm:$0xf]
    %v205 = vld [vmem:[%s0 + $0xe4] sm:$0xf]
    %v206 = vld [vmem:[%s0 + $0xe8] sm:$0xf]
    %v207 = vld [vmem:[%s0 + $0xec] sm:$0xf]
    %v208 = vld [vmem:[%s0 + $0xf0] sm:$0xf]
    %v209 = vld [vmem:[%s0 + $0xf4] sm:$0xf]
    %v210 = vld [vmem:[%s0 + $0xf8] sm:$0xf]
    %v211 = vld [vmem:[%s0 + $0xfc] sm:$0xf]
    %v212 = vld [vmem:[%s1] sm:$0xf]
    %v213 = vld [vmem:[%s1 + $0x4] sm:$0xf]
    %v214 = vld [vmem:[%s1 + $0x8] sm:$0xf]
    %v215 = vld [vmem:[%s1 + $0xc] sm:$0xf]
    %v216 = vld [vmem:[%s1 + $0x10] sm:$0x3]
    %v281 = vunpack.c.l.b16 %v148
    %v282 = vunpack.c.l.b16 %v149
    %v283 = vunpack.c.l.b16 %v150
    %v284 = vunpack.c.l.b16 %v151
    %v285 = vunpack.c.l.b16 %v152
    %v286 = vunpack.c.l.b16 %v153
    %v287 = vunpack.c.l.b16 %v154
    %v288 = vunpack.c.l.b16 %v155
    %v289 = vunpack.c.l.b16 %v156
    %v290 = vunpack.c.l.b16 %v157
    %v291 = vunpack.c.l.b16 %v158
    %v292 = vunpack.c.l.b16 %v159
    %v293 = vunpack.c.l.b16 %v160
    %v294 = vunpack.c.l.b16 %v161
    %v295 = vunpack.c.l.b16 %v162
    %v296 = vunpack.c.l.b16 %v163
    %v297 = vunpack.c.l.b16 %v164
    %v298 = vunpack.c.l.b16 %v165
    %v299 = vunpack.c.l.b16 %v166
    %v300 = vunpack.c.l.b16 %v167
    %v301 = vunpack.c.l.b16 %v168
    %v302 = vunpack.c.l.b16 %v169
    %v303 = vunpack.c.l.b16 %v170
    %v304 = vunpack.c.l.b16 %v171
    %v305 = vunpack.c.l.b16 %v172
    %v306 = vunpack.c.l.b16 %v173
    %v307 = vunpack.c.l.b16 %v174
    %v308 = vunpack.c.l.b16 %v175
    %v309 = vunpack.c.l.b16 %v176
    %v310 = vunpack.c.l.b16 %v177
    %v311 = vunpack.c.l.b16 %v178
    %v312 = vunpack.c.l.b16 %v179
    %v313 = vunpack.c.l.b16 %v180
    %v314 = vunpack.c.l.b16 %v181
    %v315 = vunpack.c.l.b16 %v182
    %v316 = vunpack.c.l.b16 %v183
    %v317 = vunpack.c.l.b16 %v184
    %v318 = vunpack.c.l.b16 %v185
    %v319 = vunpack.c.l.b16 %v186
    %v320 = vunpack.c.l.b16 %v187
    %v321 = vunpack.c.l.b16 %v188
    %v322 = vunpack.c.l.b16 %v189
    %v323 = vunpack.c.l.b16 %v190
    %v324 = vunpack.c.l.b16 %v191
    %v325 = vunpack.c.l.b16 %v192
    %v326 = vunpack.c.l.b16 %v193
    %v327 = vunpack.c.l.b16 %v194
    %v328 = vunpack.c.l.b16 %v195
    %v329 = vunpack.c.l.b16 %v196
    %v330 = vunpack.c.l.b16 %v197
    %v331 = vunpack.c.l.b16 %v198
    %v332 = vunpack.c.l.b16 %v199
    %v333 = vunpack.c.l.b16 %v200
    %v334 = vunpack.c.l.b16 %v201
    %v335 = vunpack.c.l.b16 %v202
    %v336 = vunpack.c.l.b16 %v203
    %v337 = vunpack.c.l.b16 %v204
    %v338 = vunpack.c.l.b16 %v205
    %v339 = vunpack.c.l.b16 %v206
    %v340 = vunpack.c.l.b16 %v207
    %v341 = vunpack.c.l.b16 %v208
    %v342 = vunpack.c.l.b16 %v209
    %v343 = vunpack.c.l.b16 %v210
    %v344 = vunpack.c.l.b16 %v211
    %v345 = vpack.c.b16 %v282, %v281
    %v346 = vpack.c.b16 %v284, %v283
    %v347 = vpack.c.b16 %v286, %v285
    %v348 = vpack.c.b16 %v288, %v287
    %v349 = vpack.c.b16 %v290, %v289
    %v350 = vpack.c.b16 %v292, %v291
    %v351 = vpack.c.b16 %v294, %v293
    %v352 = vpack.c.b16 %v296, %v295
    %v353 = vpack.c.b16 %v298, %v297
    %v354 = vpack.c.b16 %v300, %v299
    %v355 = vpack.c.b16 %v302, %v301
    %v356 = vpack.c.b16 %v304, %v303
    %v357 = vpack.c.b16 %v306, %v305
    %v358 = vpack.c.b16 %v308, %v307
    %v359 = vpack.c.b16 %v310, %v309
    %v360 = vpack.c.b16 %v312, %v311
    %v361 = vpack.c.b16 %v314, %v313
    %v362 = vpack.c.b16 %v316, %v315
    %v363 = vpack.c.b16 %v318, %v317
    %v364 = vpack.c.b16 %v320, %v319
    %v365 = vpack.c.b16 %v322, %v321
    %v366 = vpack.c.b16 %v324, %v323
    %v367 = vpack.c.b16 %v326, %v325
    %v368 = vpack.c.b16 %v328, %v327
    %v369 = vpack.c.b16 %v330, %v329
    %v370 = vpack.c.b16 %v332, %v331
    %v371 = vpack.c.b16 %v334, %v333
    %v372 = vpack.c.b16 %v336, %v335
    %v373 = vpack.c.b16 %v338, %v337
    %v374 = vpack.c.b16 %v340, %v339
    %v375 = vpack.c.b16 %v342, %v341
    %v376 = vpack.c.b16 %v344, %v343
    %v382 = vunpack.c.l.b16 %v212
    %v383 = vunpack.c.l.b16 %v213
    %v384 = vunpack.c.l.b16 %v214
    %v385 = vunpack.c.l.b16 %v215
    %v386 = vunpack.c.l.b16 %v216
    %v387 = vpack.c.b16 %v383, %v382
    %v388 = vpack.c.b16 %v385, %v384
    %v389 = vpack.c.b16 %v386, %v386
    %vm392 = vcmask 293888
    %v394 = vsel %vm392, %v345, 0
    %v397 = vsel %vm392, %v346, 0
    %v400 = vsel %vm392, %v347, 0
    %v403 = vsel %vm392, %v348, 0
    %v406 = vsel %vm392, %v349, 0
    %v409 = vsel %vm392, %v350, 0
    %v412 = vsel %vm392, %v351, 0
    %v415 = vsel %vm392, %v352, 0
    %v418 = vsel %vm392, %v353, 0
    %v421 = vsel %vm392, %v354, 0
    %v424 = vsel %vm392, %v355, 0
    %v427 = vsel %vm392, %v356, 0
    %v430 = vsel %vm392, %v357, 0
    %v433 = vsel %vm392, %v358, 0
    %v436 = vsel %vm392, %v359, 0
    %v439 = vsel %vm392, %v360, 0
    %v442 = vsel %vm392, %v361, 0
    %v445 = vsel %vm392, %v362, 0
    %v448 = vsel %vm392, %v363, 0
    %v451 = vsel %vm392, %v364, 0
    %v454 = vsel %vm392, %v365, 0
    %v457 = vsel %vm392, %v366, 0
    %v460 = vsel %vm392, %v367, 0
    %v463 = vsel %vm392, %v368, 0
    %v466 = vsel %vm392, %v369, 0
    %v469 = vsel %vm392, %v370, 0
    %v472 = vsel %vm392, %v371, 0
    %v475 = vsel %vm392, %v372, 0
    %v478 = vsel %vm392, %v373, 0
    %v481 = vsel %vm392, %v374, 0
    %v484 = vsel %vm392, %v375, 0
    %v487 = vsel %vm392, %v376, 0
    %vm489 = vcmask 1041408
    %v491 = vsel %vm489, %v389, 0
    %493 = vmatprep.subr.bf16.mxu0 0
    %494 = vmatpush1.bf16.msra.mxu0 0
    %495 = vmatprep.subr.bf16.mxu0 0
    %496 = vmatpush1.bf16.msra.mxu0 0
    %497 = vmatprep.subr.bf16.mxu0 0
    %498 = vmatpush1.bf16.msra.mxu0 0
    %499 = vmatprep.subr.bf16.mxu0 0
    %500 = vmatpush1.bf16.msra.mxu0 0
    %501 = vmatprep.subr.bf16.mxu0 0
    %502 = vmatpush1.bf16.msra.mxu0 0
    %503 = vmatprep.subr.bf16.mxu0 0
    %504 = vmatpush1.bf16.msra.mxu0 %v491
    %505 = vmatprep.subr.bf16.mxu0 0
    %506 = vmatpush1.bf16.msra.mxu0 %v388
    %507 = vmatprep.subr.bf16.mxu0 0
    %508 = vmatpush1.bf16.msra.mxu0 %v387
    %509 = vmatprep.subr.bf16.mxu0 0
    %510 = vmatpush2.bf16.msra.mxu0 0
    %511 = vmatprep.subr.bf16.mxu0 0
    %512 = vmatpush2.bf16.msra.mxu0 0
    %513 = vmatprep.subr.bf16.mxu0 0
    %514 = vmatpush2.bf16.msra.mxu0 0
    %515 = vmatprep.subr.bf16.mxu0 0
    %516 = vmatpush2.bf16.msra.mxu0 0
    %517 = vmatprep.subr.bf16.mxu0 0
    %518 = vmatpush2.bf16.msra.mxu0 0
    %519 = vmatprep.subr.bf16.mxu0 0
    %520 = vmatpush2.bf16.msra.mxu0 0
    %521 = vmatprep.subr.bf16.mxu0 0
    %522 = vmatpush2.bf16.msra.mxu0 0
    %523 = vmatprep.subr.bf16.mxu0 0
    %524 = vmatpush2.bf16.msra.mxu0 0
    %525 = vmatprep.mubr.bf16.mxu0 0
    %526 = vmatmul.mubr.bf16.gmra.mxu0 %v394
    %v527 = vpop.f32.mrf.mxu0
    %v528 = vadd.f32 0.0, %v527
    %v529 = vpop.f32.mrf.mxu0
    %v530 = vpop.f32.mrf.mxu0
    %v531 = vadd.f32 0.0, %v530
    %v532 = vpop.f32.mrf.mxu0
    %533 = vmatprep.mubr.bf16.mxu0 0
    %534 = vmatmul.mubr.bf16.gmra.mxu0 %v397
    %v535 = vpop.f32.mrf.mxu0
    %v536 = vadd.f32 0.0, %v535
    %v537 = vpop.f32.mrf.mxu0
    %v538 = vpop.f32.mrf.mxu0
    %v539 = vadd.f32 0.0, %v538
    %v540 = vpop.f32.mrf.mxu0
    %541 = vmatprep.mubr.bf16.mxu0 0
    %542 = vmatmul.mubr.bf16.gmra.mxu0 %v400
    %v543 = vpop.f32.mrf.mxu0
    %v544 = vadd.f32 0.0, %v543
    %v545 = vpop.f32.mrf.mxu0
    %v546 = vpop.f32.mrf.mxu0
    %v547 = vadd.f32 0.0, %v546
    %v548 = vpop.f32.mrf.mxu0
    %549 = vmatprep.mubr.bf16.mxu0 0
    %550 = vmatmul.mubr.bf16.gmra.mxu0 %v403
    %v551 = vpop.f32.mrf.mxu0
    %v552 = vadd.f32 0.0, %v551
    %v553 = vpop.f32.mrf.mxu0
    %v554 = vpop.f32.mrf.mxu0
    %v555 = vadd.f32 0.0, %v554
    %v556 = vpop.f32.mrf.mxu0
    %557 = vmatprep.mubr.bf16.mxu0 0
    %558 = vmatmul.mubr.bf16.gmra.mxu0 %v406
    %v559 = vpop.f32.mrf.mxu0
    %v560 = vadd.f32 0.0, %v559
    %v561 = vpop.f32.mrf.mxu0
    %v562 = vpop.f32.mrf.mxu0
    %v563 = vadd.f32 0.0, %v562
    %v564 = vpop.f32.mrf.mxu0
    %565 = vmatprep.mubr.bf16.mxu0 0
    %566 = vmatmul.mubr.bf16.gmra.mxu0 %v409
    %v567 = vpop.f32.mrf.mxu0
    %v568 = vadd.f32 0.0, %v567
    %v569 = vpop.f32.mrf.mxu0
    %v570 = vpop.f32.mrf.mxu0
    %v571 = vadd.f32 0.0, %v570
    %v572 = vpop.f32.mrf.mxu0
    %573 = vmatprep.mubr.bf16.mxu0 0
    %574 = vmatmul.mubr.bf16.gmra.mxu0 %v412
    %v575 = vpop.f32.mrf.mxu0
    %v576 = vadd.f32 0.0, %v575
    %v577 = vpop.f32.mrf.mxu0
    %v578 = vpop.f32.mrf.mxu0
    %v579 = vadd.f32 0.0, %v578
    %v580 = vpop.f32.mrf.mxu0
    %581 = vmatprep.mubr.bf16.mxu0 0
    %582 = vmatmul.mubr.bf16.gmra.mxu0 %v415
    %v583 = vpop.f32.mrf.mxu0
    %v584 = vadd.f32 0.0, %v583
    %v585 = vpop.f32.mrf.mxu0
    %v586 = vpop.f32.mrf.mxu0
    %v587 = vadd.f32 0.0, %v586
    %v588 = vpop.f32.mrf.mxu0
    %589 = vmatprep.mubr.bf16.mxu0 0
    %590 = vmatmul.mubr.bf16.gmra.mxu0 %v418
    %v591 = vpop.f32.mrf.mxu0
    %v592 = vadd.f32 0.0, %v591
    %v593 = vpop.f32.mrf.mxu0
    %v594 = vpop.f32.mrf.mxu0
    %v595 = vadd.f32 0.0, %v594
    %v596 = vpop.f32.mrf.mxu0
    %597 = vmatprep.mubr.bf16.mxu0 0
    %598 = vmatmul.mubr.bf16.gmra.mxu0 %v421
    %v599 = vpop.f32.mrf.mxu0
    %v600 = vadd.f32 0.0, %v599
    %v601 = vpop.f32.mrf.mxu0
    %v602 = vpop.f32.mrf.mxu0
    %v603 = vadd.f32 0.0, %v602
    %v604 = vpop.f32.mrf.mxu0
    %605 = vmatprep.mubr.bf16.mxu0 0
    %606 = vmatmul.mubr.bf16.gmra.mxu0 %v424
    %v607 = vpop.f32.mrf.mxu0
    %v608 = vadd.f32 0.0, %v607
    %v609 = vpop.f32.mrf.mxu0
    %v610 = vpop.f32.mrf.mxu0
    %v611 = vadd.f32 0.0, %v610
    %v612 = vpop.f32.mrf.mxu0
    %613 = vmatprep.mubr.bf16.mxu0 0
    %614 = vmatmul.mubr.bf16.gmra.mxu0 %v427
    %v615 = vpop.f32.mrf.mxu0
    %v616 = vadd.f32 0.0, %v615
    %v617 = vpop.f32.mrf.mxu0
    %v618 = vpop.f32.mrf.mxu0
    %v619 = vadd.f32 0.0, %v618
    %v620 = vpop.f32.mrf.mxu0
    %621 = vmatprep.mubr.bf16.mxu0 0
    %622 = vmatmul.mubr.bf16.gmra.mxu0 %v430
    %v623 = vpop.f32.mrf.mxu0
    %v624 = vadd.f32 0.0, %v623
    %v625 = vpop.f32.mrf.mxu0
    %v626 = vpop.f32.mrf.mxu0
    %v627 = vadd.f32 0.0, %v626
    %v628 = vpop.f32.mrf.mxu0
    %629 = vmatprep.mubr.bf16.mxu0 0
    %630 = vmatmul.mubr.bf16.gmra.mxu0 %v433
    %v631 = vpop.f32.mrf.mxu0
    %v632 = vadd.f32 0.0, %v631
    %v633 = vpop.f32.mrf.mxu0
    %v634 = vpop.f32.mrf.mxu0
    %v635 = vadd.f32 0.0, %v634
    %v636 = vpop.f32.mrf.mxu0
    %637 = vmatprep.mubr.bf16.mxu0 0
    %638 = vmatmul.mubr.bf16.gmra.mxu0 %v436
    %v639 = vpop.f32.mrf.mxu0
    %v640 = vadd.f32 0.0, %v639
    %v641 = vpop.f32.mrf.mxu0
    %v642 = vpop.f32.mrf.mxu0
    %v643 = vadd.f32 0.0, %v642
    %v644 = vpop.f32.mrf.mxu0
    %645 = vmatprep.mubr.bf16.mxu0 0
    %646 = vmatmul.mubr.bf16.gmra.mxu0 %v439
    %v647 = vpop.f32.mrf.mxu0
    %v648 = vadd.f32 0.0, %v647
    %v649 = vpop.f32.mrf.mxu0
    %v650 = vpop.f32.mrf.mxu0
    %v651 = vadd.f32 0.0, %v650
    %v652 = vpop.f32.mrf.mxu0
    %653 = vmatprep.mubr.bf16.mxu0 0
    %654 = vmatmul.mubr.bf16.gmra.mxu0 %v442
    %v655 = vpop.f32.mrf.mxu0
    %v656 = vadd.f32 0.0, %v655
    %v657 = vpop.f32.mrf.mxu0
    %v658 = vpop.f32.mrf.mxu0
    %v659 = vadd.f32 0.0, %v658
    %v660 = vpop.f32.mrf.mxu0
    %661 = vmatprep.mubr.bf16.mxu0 0
    %662 = vmatmul.mubr.bf16.gmra.mxu0 %v445
    %v663 = vpop.f32.mrf.mxu0
    %v664 = vadd.f32 0.0, %v663
    %v665 = vpop.f32.mrf.mxu0
    %v666 = vpop.f32.mrf.mxu0
    %v667 = vadd.f32 0.0, %v666
    %v668 = vpop.f32.mrf.mxu0
    %669 = vmatprep.mubr.bf16.mxu0 0
    %670 = vmatmul.mubr.bf16.gmra.mxu0 %v448
    %v671 = vpop.f32.mrf.mxu0
    %v672 = vadd.f32 0.0, %v671
    %v673 = vpop.f32.mrf.mxu0
    %v674 = vpop.f32.mrf.mxu0
    %v675 = vadd.f32 0.0, %v674
    %v676 = vpop.f32.mrf.mxu0
    %677 = vmatprep.mubr.bf16.mxu0 0
    %678 = vmatmul.mubr.bf16.gmra.mxu0 %v451
    %v679 = vpop.f32.mrf.mxu0
    %v680 = vadd.f32 0.0, %v679
    %v681 = vpop.f32.mrf.mxu0
    %v682 = vpop.f32.mrf.mxu0
    %v683 = vadd.f32 0.0, %v682
    %v684 = vpop.f32.mrf.mxu0
    %685 = vmatprep.mubr.bf16.mxu0 0
    %686 = vmatmul.mubr.bf16.gmra.mxu0 %v454
    %v687 = vpop.f32.mrf.mxu0
    %v688 = vadd.f32 0.0, %v687
    %v689 = vpop.f32.mrf.mxu0
    %v690 = vpop.f32.mrf.mxu0
    %v691 = vadd.f32 0.0, %v690
    %v692 = vpop.f32.mrf.mxu0
    %693 = vmatprep.mubr.bf16.mxu0 0
    %694 = vmatmul.mubr.bf16.gmra.mxu0 %v457
    %v695 = vpop.f32.mrf.mxu0
    %v696 = vadd.f32 0.0, %v695
    %v697 = vpop.f32.mrf.mxu0
    %v698 = vpop.f32.mrf.mxu0
    %v699 = vadd.f32 0.0, %v698
    %v700 = vpop.f32.mrf.mxu0
    %701 = vmatprep.mubr.bf16.mxu0 0
    %702 = vmatmul.mubr.bf16.gmra.mxu0 %v460
    %v703 = vpop.f32.mrf.mxu0
    %v704 = vadd.f32 0.0, %v703
    %v705 = vpop.f32.mrf.mxu0
    %v706 = vpop.f32.mrf.mxu0
    %v707 = vadd.f32 0.0, %v706
    %v708 = vpop.f32.mrf.mxu0
    %709 = vmatprep.mubr.bf16.mxu0 0
    %710 = vmatmul.mubr.bf16.gmra.mxu0 %v463
    %v711 = vpop.f32.mrf.mxu0
    %v712 = vadd.f32 0.0, %v711
    %v713 = vpop.f32.mrf.mxu0
    %v714 = vpop.f32.mrf.mxu0
    %v715 = vadd.f32 0.0, %v714
    %v716 = vpop.f32.mrf.mxu0
    %717 = vmatprep.mubr.bf16.mxu0 0
    %718 = vmatmul.mubr.bf16.gmra.mxu0 %v466
    %v719 = vpop.f32.mrf.mxu0
    %v720 = vadd.f32 0.0, %v719
    %v721 = vpop.f32.mrf.mxu0
    %v722 = vpop.f32.mrf.mxu0
    %v723 = vadd.f32 0.0, %v722
    %v724 = vpop.f32.mrf.mxu0
    %725 = vmatprep.mubr.bf16.mxu0 0
    %726 = vmatmul.mubr.bf16.gmra.mxu0 %v469
    %v727 = vpop.f32.mrf.mxu0
    %v728 = vadd.f32 0.0, %v727
    %v729 = vpop.f32.mrf.mxu0
    %v730 = vpop.f32.mrf.mxu0
    %v731 = vadd.f32 0.0, %v730
    %v732 = vpop.f32.mrf.mxu0
    %733 = vmatprep.mubr.bf16.mxu0 0
    %734 = vmatmul.mubr.bf16.gmra.mxu0 %v472
    %v735 = vpop.f32.mrf.mxu0
    %v736 = vadd.f32 0.0, %v735
    %v737 = vpop.f32.mrf.mxu0
    %v738 = vpop.f32.mrf.mxu0
    %v739 = vadd.f32 0.0, %v738
    %v740 = vpop.f32.mrf.mxu0
    %741 = vmatprep.mubr.bf16.mxu0 0
    %742 = vmatmul.mubr.bf16.gmra.mxu0 %v475
    %v743 = vpop.f32.mrf.mxu0
    %v744 = vadd.f32 0.0, %v743
    %v745 = vpop.f32.mrf.mxu0
    %v746 = vpop.f32.mrf.mxu0
    %v747 = vadd.f32 0.0, %v746
    %v748 = vpop.f32.mrf.mxu0
    %749 = vmatprep.mubr.bf16.mxu0 0
    %750 = vmatmul.mubr.bf16.gmra.mxu0 %v478
    %v751 = vpop.f32.mrf.mxu0
    %v752 = vadd.f32 0.0, %v751
    %v753 = vpop.f32.mrf.mxu0
    %v754 = vpop.f32.mrf.mxu0
    %v755 = vadd.f32 0.0, %v754
    %v756 = vpop.f32.mrf.mxu0
    %757 = vmatprep.mubr.bf16.mxu0 0
    %758 = vmatmul.mubr.bf16.gmra.mxu0 %v481
    %v759 = vpop.f32.mrf.mxu0
    %v760 = vadd.f32 0.0, %v759
    %v761 = vpop.f32.mrf.mxu0
    %v762 = vpop.f32.mrf.mxu0
    %v763 = vadd.f32 0.0, %v762
    %v764 = vpop.f32.mrf.mxu0
    %765 = vmatprep.mubr.bf16.mxu0 0
    %766 = vmatmul.mubr.bf16.gmra.mxu0 %v484
    %v767 = vpop.f32.mrf.mxu0
    %v768 = vadd.f32 0.0, %v767
    %v769 = vpop.f32.mrf.mxu0
    %v770 = vpop.f32.mrf.mxu0
    %v771 = vadd.f32 0.0, %v770
    %v772 = vpop.f32.mrf.mxu0
    %773 = vmatprep.mubr.bf16.mxu0 0
    %774 = vmatmul.mubr.bf16.gmra.mxu0 %v487
    %v775 = vpop.f32.mrf.mxu0
    %v776 = vadd.f32 0.0, %v775
    %v777 = vpop.f32.mrf.mxu0
    %v778 = vpop.f32.mrf.mxu0
    %v779 = vadd.f32 0.0, %v778
    %v780 = vpop.f32.mrf.mxu0
    %781 = vdwg.mxu0
    %v782 = vadd.f32 %v84, %v528
    %v783 = vadd.f32 %v85, %v531
    %v784 = vadd.f32 %v86, %v536
    %v785 = vadd.f32 %v87, %v539
    %v786 = vadd.f32 %v88, %v544
    %v787 = vadd.f32 %v89, %v547
    %v788 = vadd.f32 %v90, %v552
    %v789 = vadd.f32 %v91, %v555
    %v790 = vadd.f32 %v92, %v560
    %v791 = vadd.f32 %v93, %v563
    %v792 = vadd.f32 %v94, %v568
    %v793 = vadd.f32 %v95, %v571
    %v794 = vadd.f32 %v96, %v576
    %v795 = vadd.f32 %v97, %v579
    %v796 = vadd.f32 %v98, %v584
    %v797 = vadd.f32 %v99, %v587
    %v798 = vadd.f32 %v100, %v592
    %v799 = vadd.f32 %v101, %v595
    %v800 = vadd.f32 %v102, %v600
    %v801 = vadd.f32 %v103, %v603
    %v802 = vadd.f32 %v104, %v608
    %v803 = vadd.f32 %v105, %v611
    %v804 = vadd.f32 %v106, %v616
    %v805 = vadd.f32 %v107, %v619
    %v806 = vadd.f32 %v108, %v624
    %v807 = vadd.f32 %v109, %v627
    %v808 = vadd.f32 %v110, %v632
    %v809 = vadd.f32 %v111, %v635
    %v810 = vadd.f32 %v112, %v640
    %v811 = vadd.f32 %v113, %v643
    %v812 = vadd.f32 %v114, %v648
    %v813 = vadd.f32 %v115, %v651
    %v814 = vadd.f32 %v116, %v656
    %v815 = vadd.f32 %v117, %v659
    %v816 = vadd.f32 %v118, %v664
    %v817 = vadd.f32 %v119, %v667
    %v818 = vadd.f32 %v120, %v672
    %v819 = vadd.f32 %v121, %v675
    %v820 = vadd.f32 %v122, %v680
    %v821 = vadd.f32 %v123, %v683
    %v822 = vadd.f32 %v124, %v688
    %v823 = vadd.f32 %v125, %v691
    %v824 = vadd.f32 %v126, %v696
    %v825 = vadd.f32 %v127, %v699
    %v826 = vadd.f32 %v128, %v704
    %v827 = vadd.f32 %v129, %v707
    %v828 = vadd.f32 %v130, %v712
    %v829 = vadd.f32 %v131, %v715
    %v830 = vadd.f32 %v132, %v720
    %v831 = vadd.f32 %v133, %v723
    %v832 = vadd.f32 %v134, %v728
    %v833 = vadd.f32 %v135, %v731
    %v834 = vadd.f32 %v136, %v736
    %v835 = vadd.f32 %v137, %v739
    %v836 = vadd.f32 %v138, %v744
    %v837 = vadd.f32 %v139, %v747
    %v838 = vadd.f32 %v140, %v752
    %v839 = vadd.f32 %v141, %v755
    %v840 = vadd.f32 %v142, %v760
    %v841 = vadd.f32 %v143, %v763
    %v842 = vadd.f32 %v144, %v768
    %v843 = vadd.f32 %v145, %v771
    %v844 = vadd.f32 %v146, %v776
    %v845 = vadd.f32 %v147, %v779
    %846 = vst [vmem:[#allocation2] sm:$0xff] %v782
    %847 = vst [vmem:[#allocation2 + $0x8] sm:$0xff] %v783
    %848 = vst [vmem:[#allocation2 + $0x10] sm:$0xff] %v784
    %849 = vst [vmem:[#allocation2 + $0x18] sm:$0xff] %v785
    %850 = vst [vmem:[#allocation2 + $0x20] sm:$0xff] %v786
    %851 = vst [vmem:[#allocation2 + $0x28] sm:$0xff] %v787
    %852 = vst [vmem:[#allocation2 + $0x30] sm:$0xff] %v788
    %853 = vst [vmem:[#allocation2 + $0x38] sm:$0xff] %v789
    %854 = vst [vmem:[#allocation2 + $0x40] sm:$0xff] %v790
    %855 = vst [vmem:[#allocation2 + $0x48] sm:$0xff] %v791
    %856 = vst [vmem:[#allocation2 + $0x50] sm:$0xff] %v792
    %857 = vst [vmem:[#allocation2 + $0x58] sm:$0xff] %v793
    %858 = vst [vmem:[#allocation2 + $0x60] sm:$0xff] %v794
    %859 = vst [vmem:[#allocation2 + $0x68] sm:$0xff] %v795
    %860 = vst [vmem:[#allocation2 + $0x70] sm:$0xff] %v796
    %861 = vst [vmem:[#allocation2 + $0x78] sm:$0xff] %v797
    %862 = vst [vmem:[#allocation2 + $0x80] sm:$0xff] %v798
    %863 = vst [vmem:[#allocation2 + $0x88] sm:$0xff] %v799
    %864 = vst [vmem:[#allocation2 + $0x90] sm:$0xff] %v800
    %865 = vst [vmem:[#allocation2 + $0x98] sm:$0xff] %v801
    %866 = vst [vmem:[#allocation2 + $0xa0] sm:$0xff] %v802
    %867 = vst [vmem:[#allocation2 + $0xa8] sm:$0xff] %v803
    %868 = vst [vmem:[#allocation2 + $0xb0] sm:$0xff] %v804
    %869 = vst [vmem:[#allocation2 + $0xb8] sm:$0xff] %v805
    %870 = vst [vmem:[#allocation2 + $0xc0] sm:$0xff] %v806
    %871 = vst [vmem:[#allocation2 + $0xc8] sm:$0xff] %v807
    %872 = vst [vmem:[#allocation2 + $0xd0] sm:$0xff] %v808
    %873 = vst [vmem:[#allocation2 + $0xd8] sm:$0xff] %v809
    %874 = vst [vmem:[#allocation2 + $0xe0] sm:$0xff] %v810
    %875 = vst [vmem:[#allocation2 + $0xe8] sm:$0xff] %v811
    %876 = vst [vmem:[#allocation2 + $0xf0] sm:$0xff] %v812
    %877 = vst [vmem:[#allocation2 + $0xf8] sm:$0xff] %v813
    %878 = vst [vmem:[#allocation2 + $0x100] sm:$0xff] %v814
    %879 = vst [vmem:[#allocation2 + $0x108] sm:$0xff] %v815
    %880 = vst [vmem:[#allocation2 + $0x110] sm:$0xff] %v816
    %881 = vst [vmem:[#allocation2 + $0x118] sm:$0xff] %v817
    %882 = vst [vmem:[#allocation2 + $0x120] sm:$0xff] %v818
    %883 = vst [vmem:[#allocation2 + $0x128] sm:$0xff] %v819
    %884 = vst [vmem:[#allocation2 + $0x130] sm:$0xff] %v820
    %885 = vst [vmem:[#allocation2 + $0x138] sm:$0xff] %v821
    %886 = vst [vmem:[#allocation2 + $0x140] sm:$0xff] %v822
    %887 = vst [vmem:[#allocation2 + $0x148] sm:$0xff] %v823
    %888 = vst [vmem:[#allocation2 + $0x150] sm:$0xff] %v824
    %889 = vst [vmem:[#allocation2 + $0x158] sm:$0xff] %v825
    %890 = vst [vmem:[#allocation2 + $0x160] sm:$0xff] %v826
    %891 = vst [vmem:[#allocation2 + $0x168] sm:$0xff] %v827
    %892 = vst [vmem:[#allocation2 + $0x170] sm:$0xff] %v828
    %893 = vst [vmem:[#allocation2 + $0x178] sm:$0xff] %v829
    %894 = vst [vmem:[#allocation2 + $0x180] sm:$0xff] %v830
    %895 = vst [vmem:[#allocation2 + $0x188] sm:$0xff] %v831
    %896 = vst [vmem:[#allocation2 + $0x190] sm:$0xff] %v832
    %897 = vst [vmem:[#allocation2 + $0x198] sm:$0xff] %v833
    %898 = vst [vmem:[#allocation2 + $0x1a0] sm:$0xff] %v834
    %899 = vst [vmem:[#allocation2 + $0x1a8] sm:$0xff] %v835
    %900 = vst [vmem:[#allocation2 + $0x1b0] sm:$0xff] %v836
    %901 = vst [vmem:[#allocation2 + $0x1b8] sm:$0xff] %v837
    %902 = vst [vmem:[#allocation2 + $0x1c0] sm:$0xff] %v838
    %903 = vst [vmem:[#allocation2 + $0x1c8] sm:$0xff] %v839
    %904 = vst [vmem:[#allocation2 + $0x1d0] sm:$0xff] %v840
    %905 = vst [vmem:[#allocation2 + $0x1d8] sm:$0xff] %v841
    %906 = vst [vmem:[#allocation2 + $0x1e0] sm:$0xff] %v842
    %907 = vst [vmem:[#allocation2 + $0x1e8] sm:$0xff] %v843
    %908 = vst [vmem:[#allocation2 + $0x1f0] sm:$0xff] %v844
    %909 = vst [vmem:[#allocation2 + $0x1f8] sm:$0xff] %v845
    // Predicated region
    $region14: #{tpu_custom_call.1} parent=1 // pred_check
      %p910 = pneg %p16
    $region15: #{tpu_custom_call.1} parent=1 // pred_check_branch
      %912 = sbr.rel (%p910) target = $region17
    $region16: #{tpu_custom_call.1} parent=1 // pred_region
      %v913 = vld [vmem:[#allocation2] sm:$0xff]
      %v914 = vld [vmem:[#allocation2 + $0x8] sm:$0xff]
      %v915 = vld [vmem:[#allocation2 + $0x10] sm:$0xff]
      %v916 = vld [vmem:[#allocation2 + $0x18] sm:$0xff]
      %v917 = vld [vmem:[#allocation2 + $0x20] sm:$0xff]
      %v918 = vld [vmem:[#allocation2 + $0x28] sm:$0xff]
      %v919 = vld [vmem:[#allocation2 + $0x30] sm:$0xff]
      %v920 = vld [vmem:[#allocation2 + $0x38] sm:$0xff]
      %v921 = vld [vmem:[#allocation2 + $0x40] sm:$0xff]
      %v922 = vld [vmem:[#allocation2 + $0x48] sm:$0xff]
      %v923 = vld [vmem:[#allocation2 + $0x50] sm:$0xff]
      %v924 = vld [vmem:[#allocation2 + $0x58] sm:$0xff]
      %v925 = vld [vmem:[#allocation2 + $0x60] sm:$0xff]
      %v926 = vld [vmem:[#allocation2 + $0x68] sm:$0xff]
      %v927 = vld [vmem:[#allocation2 + $0x70] sm:$0xff]
      %v928 = vld [vmem:[#allocation2 + $0x78] sm:$0xff]
      %v929 = vld [vmem:[#allocation2 + $0x80] sm:$0xff]
      %v930 = vld [vmem:[#allocation2 + $0x88] sm:$0xff]
      %v931 = vld [vmem:[#allocation2 + $0x90] sm:$0xff]
      %v932 = vld [vmem:[#allocation2 + $0x98] sm:$0xff]
      %v933 = vld [vmem:[#allocation2 + $0xa0] sm:$0xff]
      %v934 = vld [vmem:[#allocation2 + $0xa8] sm:$0xff]
      %v935 = vld [vmem:[#allocation2 + $0xb0] sm:$0xff]
      %v936 = vld [vmem:[#allocation2 + $0xb8] sm:$0xff]
      %v937 = vld [vmem:[#allocation2 + $0xc0] sm:$0xff]
      %v938 = vld [vmem:[#allocation2 + $0xc8] sm:$0xff]
      %v939 = vld [vmem:[#allocation2 + $0xd0] sm:$0xff]
      %v940 = vld [vmem:[#allocation2 + $0xd8] sm:$0xff]
      %v941 = vld [vmem:[#allocation2 + $0xe0] sm:$0xff]
      %v942 = vld [vmem:[#allocation2 + $0xe8] sm:$0xff]
      %v943 = vld [vmem:[#allocation2 + $0xf0] sm:$0xff]
      %v944 = vld [vmem:[#allocation2 + $0xf8] sm:$0xff]
      %v945 = vld [vmem:[#allocation2 + $0x100] sm:$0xff]
      %v946 = vld [vmem:[#allocation2 + $0x108] sm:$0xff]
      %v947 = vld [vmem:[#allocation2 + $0x110] sm:$0xff]
      %v948 = vld [vmem:[#allocation2 + $0x118] sm:$0xff]
      %v949 = vld [vmem:[#allocation2 + $0x120] sm:$0xff]
      %v950 = vld [vmem:[#allocation2 + $0x128] sm:$0xff]
      %v951 = vld [vmem:[#allocation2 + $0x130] sm:$0xff]
      %v952 = vld [vmem:[#allocation2 + $0x138] sm:$0xff]
      %v953 = vld [vmem:[#allocation2 + $0x140] sm:$0xff]
      %v954 = vld [vmem:[#allocation2 + $0x148] sm:$0xff]
      %v955 = vld [vmem:[#allocation2 + $0x150] sm:$0xff]
      %v956 = vld [vmem:[#allocation2 + $0x158] sm:$0xff]
      %v957 = vld [vmem:[#allocation2 + $0x160] sm:$0xff]
      %v958 = vld [vmem:[#allocation2 + $0x168] sm:$0xff]
      %v959 = vld [vmem:[#allocation2 + $0x170] sm:$0xff]
      %v960 = vld [vmem:[#allocation2 + $0x178] sm:$0xff]
      %v961 = vld [vmem:[#allocation2 + $0x180] sm:$0xff]
      %v962 = vld [vmem:[#allocation2 + $0x188] sm:$0xff]
      %v963 = vld [vmem:[#allocation2 + $0x190] sm:$0xff]
      %v964 = vld [vmem:[#allocation2 + $0x198] sm:$0xff]
      %v965 = vld [vmem:[#allocation2 + $0x1a0] sm:$0xff]
      %v966 = vld [vmem:[#allocation2 + $0x1a8] sm:$0xff]
      %v967 = vld [vmem:[#allocation2 + $0x1b0] sm:$0xff]
      %v968 = vld [vmem:[#allocation2 + $0x1b8] sm:$0xff]
      %v969 = vld [vmem:[#allocation2 + $0x1c0] sm:$0xff]
      %v970 = vld [vmem:[#allocation2 + $0x1c8] sm:$0xff]
      %v971 = vld [vmem:[#allocation2 + $0x1d0] sm:$0xff]
      %v972 = vld [vmem:[#allocation2 + $0x1d8] sm:$0xff]
      %v973 = vld [vmem:[#allocation2 + $0x1e0] sm:$0xff]
      %v974 = vld [vmem:[#allocation2 + $0x1e8] sm:$0xff]
      %v975 = vld [vmem:[#allocation2 + $0x1f0] sm:$0xff]
      %v976 = vld [vmem:[#allocation2 + $0x1f8] sm:$0xff]
      %v977 = vpack.c.bf16 %v914, %v913
      %v978 = vpack.c.bf16 %v916, %v915
      %v979 = vpack.c.bf16 %v918, %v917
      %v980 = vpack.c.bf16 %v920, %v919
      %v981 = vpack.c.bf16 %v922, %v921
      %v982 = vpack.c.bf16 %v924, %v923
      %v983 = vpack.c.bf16 %v926, %v925
      %v984 = vpack.c.bf16 %v928, %v927
      %v985 = vpack.c.bf16 %v930, %v929
      %v986 = vpack.c.bf16 %v932, %v931
      %v987 = vpack.c.bf16 %v934, %v933
      %v988 = vpack.c.bf16 %v936, %v935
      %v989 = vpack.c.bf16 %v938, %v937
      %v990 = vpack.c.bf16 %v940, %v939
      %v991 = vpack.c.bf16 %v942, %v941
      %v992 = vpack.c.bf16 %v944, %v943
      %v993 = vpack.c.bf16 %v946, %v945
      %v994 = vpack.c.bf16 %v948, %v947
      %v995 = vpack.c.bf16 %v950, %v949
      %v996 = vpack.c.bf16 %v952, %v951
      %v997 = vpack.c.bf16 %v954, %v953
      %v998 = vpack.c.bf16 %v956, %v955
      %v999 = vpack.c.bf16 %v958, %v957
      %v1000 = vpack.c.bf16 %v960, %v959
      %v1001 = vpack.c.bf16 %v962, %v961
      %v1002 = vpack.c.bf16 %v964, %v963
      %v1003 = vpack.c.bf16 %v966, %v965
      %v1004 = vpack.c.bf16 %v968, %v967
      %v1005 = vpack.c.bf16 %v970, %v969
      %v1006 = vpack.c.bf16 %v972, %v971
      %v1007 = vpack.c.bf16 %v974, %v973
      %v1008 = vpack.c.bf16 %v976, %v975
      %v1041 = vunpack.c.l.b16 %v977
      %v1042 = vunpack.c.h.b16 %v977
      %v1043 = vunpack.c.l.b16 %v978
      %v1044 = vunpack.c.h.b16 %v978
      %v1045 = vunpack.c.l.b16 %v979
      %v1046 = vunpack.c.h.b16 %v979
      %v1047 = vunpack.c.l.b16 %v980
      %v1048 = vunpack.c.h.b16 %v980
      %v1049 = vunpack.c.l.b16 %v981
      %v1050 = vunpack.c.h.b16 %v981
      %v1051 = vunpack.c.l.b16 %v982
      %v1052 = vunpack.c.h.b16 %v982
      %v1053 = vunpack.c.l.b16 %v983
      %v1054 = vunpack.c.h.b16 %v983
      %v1055 = vunpack.c.l.b16 %v984
      %v1056 = vunpack.c.h.b16 %v984
      %v1057 = vunpack.c.l.b16 %v985
      %v1058 = vunpack.c.h.b16 %v985
      %v1059 = vunpack.c.l.b16 %v986
      %v1060 = vunpack.c.h.b16 %v986
      %v1061 = vunpack.c.l.b16 %v987
      %v1062 = vunpack.c.h.b16 %v987
      %v1063 = vunpack.c.l.b16 %v988
      %v1064 = vunpack.c.h.b16 %v988
      %v1065 = vunpack.c.l.b16 %v989
      %v1066 = vunpack.c.h.b16 %v989
      %v1067 = vunpack.c.l.b16 %v990
      %v1068 = vunpack.c.h.b16 %v990
      %v1069 = vunpack.c.l.b16 %v991
      %v1070 = vunpack.c.h.b16 %v991
      %v1071 = vunpack.c.l.b16 %v992
      %v1072 = vunpack.c.h.b16 %v992
      %v1073 = vunpack.c.l.b16 %v993
      %v1074 = vunpack.c.h.b16 %v993
      %v1075 = vunpack.c.l.b16 %v994
      %v1076 = vunpack.c.h.b16 %v994
      %v1077 = vunpack.c.l.b16 %v995
      %v1078 = vunpack.c.h.b16 %v995
      %v1079 = vunpack.c.l.b16 %v996
      %v1080 = vunpack.c.h.b16 %v996
      %v1081 = vunpack.c.l.b16 %v997
      %v1082 = vunpack.c.h.b16 %v997
      %v1083 = vunpack.c.l.b16 %v998
      %v1084 = vunpack.c.h.b16 %v998
      %v1085 = vunpack.c.l.b16 %v999
      %v1086 = vunpack.c.h.b16 %v999
      %v1087 = vunpack.c.l.b16 %v1000
      %v1088 = vunpack.c.h.b16 %v1000
      %v1089 = vunpack.c.l.b16 %v1001
      %v1090 = vunpack.c.h.b16 %v1001
      %v1091 = vunpack.c.l.b16 %v1002
      %v1092 = vunpack.c.h.b16 %v1002
      %v1093 = vunpack.c.l.b16 %v1003
      %v1094 = vunpack.c.h.b16 %v1003
      %v1095 = vunpack.c.l.b16 %v1004
      %v1096 = vunpack.c.h.b16 %v1004
      %v1097 = vunpack.c.l.b16 %v1005
      %v1098 = vunpack.c.h.b16 %v1005
      %v1099 = vunpack.c.l.b16 %v1006
      %v1100 = vunpack.c.h.b16 %v1006
      %v1101 = vunpack.c.l.b16 %v1007
      %v1102 = vunpack.c.h.b16 %v1007
      %v1103 = vunpack.c.l.b16 %v1008
      %v1104 = vunpack.c.h.b16 %v1008
      %v1105 = vpack.c.b16 %v1041, %v1041
      %v1106 = vpack.c.b16 %v1042, %v1042
      %v1107 = vpack.c.b16 %v1043, %v1043
      %v1108 = vpack.c.b16 %v1044, %v1044
      %v1109 = vpack.c.b16 %v1045, %v1045
      %v1110 = vpack.c.b16 %v1046, %v1046
      %v1111 = vpack.c.b16 %v1047, %v1047
      %v1112 = vpack.c.b16 %v1048, %v1048
      %v1113 = vpack.c.b16 %v1049, %v1049
      %v1114 = vpack.c.b16 %v1050, %v1050
      %v1115 = vpack.c.b16 %v1051, %v1051
      %v1116 = vpack.c.b16 %v1052, %v1052
      %v1117 = vpack.c.b16 %v1053, %v1053
      %v1118 = vpack.c.b16 %v1054, %v1054
      %v1119 = vpack.c.b16 %v1055, %v1055
      %v1120 = vpack.c.b16 %v1056, %v1056
      %v1121 = vpack.c.b16 %v1057, %v1057
      %v1122 = vpack.c.b16 %v1058, %v1058
      %v1123 = vpack.c.b16 %v1059, %v1059
      %v1124 = vpack.c.b16 %v1060, %v1060
      %v1125 = vpack.c.b16 %v1061, %v1061
      %v1126 = vpack.c.b16 %v1062, %v1062
      %v1127 = vpack.c.b16 %v1063, %v1063
      %v1128 = vpack.c.b16 %v1064, %v1064
      %v1129 = vpack.c.b16 %v1065, %v1065
      %v1130 = vpack.c.b16 %v1066, %v1066
      %v1131 = vpack.c.b16 %v1067, %v1067
      %v1132 = vpack.c.b16 %v1068, %v1068
      %v1133 = vpack.c.b16 %v1069, %v1069
      %v1134 = vpack.c.b16 %v1070, %v1070
      %v1135 = vpack.c.b16 %v1071, %v1071
      %v1136 = vpack.c.b16 %v1072, %v1072
      %v1137 = vpack.c.b16 %v1073, %v1073
      %v1138 = vpack.c.b16 %v1074, %v1074
      %v1139 = vpack.c.b16 %v1075, %v1075
      %v1140 = vpack.c.b16 %v1076, %v1076
      %v1141 = vpack.c.b16 %v1077, %v1077
      %v1142 = vpack.c.b16 %v1078, %v1078
      %v1143 = vpack.c.b16 %v1079, %v1079
      %v1144 = vpack.c.b16 %v1080, %v1080
      %v1145 = vpack.c.b16 %v1081, %v1081
      %v1146 = vpack.c.b16 %v1082, %v1082
      %v1147 = vpack.c.b16 %v1083, %v1083
      %v1148 = vpack.c.b16 %v1084, %v1084
      %v1149 = vpack.c.b16 %v1085, %v1085
      %v1150 = vpack.c.b16 %v1086, %v1086
      %v1151 = vpack.c.b16 %v1087, %v1087
      %v1152 = vpack.c.b16 %v1088, %v1088
      %v1153 = vpack.c.b16 %v1089, %v1089
      %v1154 = vpack.c.b16 %v1090, %v1090
      %v1155 = vpack.c.b16 %v1091, %v1091
      %v1156 = vpack.c.b16 %v1092, %v1092
      %v1157 = vpack.c.b16 %v1093, %v1093
      %v1158 = vpack.c.b16 %v1094, %v1094
      %v1159 = vpack.c.b16 %v1095, %v1095
      %v1160 = vpack.c.b16 %v1096, %v1096
      %v1161 = vpack.c.b16 %v1097, %v1097
      %v1162 = vpack.c.b16 %v1098, %v1098
      %v1163 = vpack.c.b16 %v1099, %v1099
      %v1164 = vpack.c.b16 %v1100, %v1100
      %v1165 = vpack.c.b16 %v1101, %v1101
      %v1166 = vpack.c.b16 %v1102, %v1102
      %v1167 = vpack.c.b16 %v1103, %v1103
      %v1168 = vpack.c.b16 %v1104, %v1104
      %1233 = vst [vmem:[#allocation3] sm:$0xf] %v1105
      %1234 = vst [vmem:[#allocation3 + $0x4] sm:$0xf] %v1106
      %1235 = vst [vmem:[#allocation3 + $0x8] sm:$0xf] %v1107
      %1236 = vst [vmem:[#allocation3 + $0xc] sm:$0xf] %v1108
      %1237 = vst [vmem:[#allocation3 + $0x10] sm:$0xf] %v1109
      %1238 = vst [vmem:[#allocation3 + $0x14] sm:$0xf] %v1110
      %1239 = vst [vmem:[#allocation3 + $0x18] sm:$0xf] %v1111
      %1240 = vst [vmem:[#allocation3 + $0x1c] sm:$0xf] %v1112
      %1241 = vst [vmem:[#allocation3 + $0x20] sm:$0xf] %v1113
      %1242 = vst [vmem:[#allocation3 + $0x24] sm:$0xf] %v1114
      %1243 = vst [vmem:[#allocation3 + $0x28] sm:$0xf] %v1115
      %1244 = vst [vmem:[#allocation3 + $0x2c] sm:$0xf] %v1116
      %1245 = vst [vmem:[#allocation3 + $0x30] sm:$0xf] %v1117
      %1246 = vst [vmem:[#allocation3 + $0x34] sm:$0xf] %v1118
      %1247 = vst [vmem:[#allocation3 + $0x38] sm:$0xf] %v1119
      %1248 = vst [vmem:[#allocation3 + $0x3c] sm:$0xf] %v1120
      %1249 = vst [vmem:[#allocation3 + $0x40] sm:$0xf] %v1121
      %1250 = vst [vmem:[#allocation3 + $0x44] sm:$0xf] %v1122
      %1251 = vst [vmem:[#allocation3 + $0x48] sm:$0xf] %v1123
      %1252 = vst [vmem:[#allocation3 + $0x4c] sm:$0xf] %v1124
      %1253 = vst [vmem:[#allocation3 + $0x50] sm:$0xf] %v1125
      %1254 = vst [vmem:[#allocation3 + $0x54] sm:$0xf] %v1126
      %1255 = vst [vmem:[#allocation3 + $0x58] sm:$0xf] %v1127
      %1256 = vst [vmem:[#allocation3 + $0x5c] sm:$0xf] %v1128
      %1257 = vst [vmem:[#allocation3 + $0x60] sm:$0xf] %v1129
      %1258 = vst [vmem:[#allocation3 + $0x64] sm:$0xf] %v1130
      %1259 = vst [vmem:[#allocation3 + $0x68] sm:$0xf] %v1131
      %1260 = vst [vmem:[#allocation3 + $0x6c] sm:$0xf] %v1132
      %1261 = vst [vmem:[#allocation3 + $0x70] sm:$0xf] %v1133
      %1262 = vst [vmem:[#allocation3 + $0x74] sm:$0xf] %v1134
      %1263 = vst [vmem:[#allocation3 + $0x78] sm:$0xf] %v1135
      %1264 = vst [vmem:[#allocation3 + $0x7c] sm:$0xf] %v1136
      %1265 = vst [vmem:[#allocation3 + $0x80] sm:$0xf] %v1137
      %1266 = vst [vmem:[#allocation3 + $0x84] sm:$0xf] %v1138
      %1267 = vst [vmem:[#allocation3 + $0x88] sm:$0xf] %v1139
      %1268 = vst [vmem:[#allocation3 + $0x8c] sm:$0xf] %v1140
      %1269 = vst [vmem:[#allocation3 + $0x90] sm:$0xf] %v1141
      %1270 = vst [vmem:[#allocation3 + $0x94] sm:$0xf] %v1142
      %1271 = vst [vmem:[#allocation3 + $0x98] sm:$0xf] %v1143
      %1272 = vst [vmem:[#allocation3 + $0x9c] sm:$0xf] %v1144
      %1273 = vst [vmem:[#allocation3 + $0xa0] sm:$0xf] %v1145
      %1274 = vst [vmem:[#allocation3 + $0xa4] sm:$0xf] %v1146
      %1275 = vst [vmem:[#allocation3 + $0xa8] sm:$0xf] %v1147
      %1276 = vst [vmem:[#allocation3 + $0xac] sm:$0xf] %v1148
      %1277 = vst [vmem:[#allocation3 + $0xb0] sm:$0xf] %v1149
      %1278 = vst [vmem:[#allocation3 + $0xb4] sm:$0xf] %v1150
      %1279 = vst [vmem:[#allocation3 + $0xb8] sm:$0xf] %v1151
      %1280 = vst [vmem:[#allocation3 + $0xbc] sm:$0xf] %v1152
      %1281 = vst [vmem:[#allocation3 + $0xc0] sm:$0xf] %v1153
      %1282 = vst [vmem:[#allocation3 + $0xc4] sm:$0xf] %v1154
      %1283 = vst [vmem:[#allocation3 + $0xc8] sm:$0xf] %v1155
      %1284 = vst [vmem:[#allocation3 + $0xcc] sm:$0xf] %v1156
      %1285 = vst [vmem:[#allocation3 + $0xd0] sm:$0xf] %v1157
      %1286 = vst [vmem:[#allocation3 + $0xd4] sm:$0xf] %v1158
      %1287 = vst [vmem:[#allocation3 + $0xd8] sm:$0xf] %v1159
      %1288 = vst [vmem:[#allocation3 + $0xdc] sm:$0xf] %v1160
      %1289 = vst [vmem:[#allocation3 + $0xe0] sm:$0xf] %v1161
      %1290 = vst [vmem:[#allocation3 + $0xe4] sm:$0xf] %v1162
      %1291 = vst [vmem:[#allocation3 + $0xe8] sm:$0xf] %v1163
      %1292 = vst [vmem:[#allocation3 + $0xec] sm:$0xf] %v1164
      %1293 = vst [vmem:[#allocation3 + $0xf0] sm:$0xf] %v1165
      %1294 = vst [vmem:[#allocation3 + $0xf4] sm:$0xf] %v1166
      %1295 = vst [vmem:[#allocation3 + $0xf8] sm:$0xf] %v1167
      %1296 = vst [vmem:[#allocation3 + $0xfc] sm:$0xf] %v1168
      %v1297 = vadd.f32 %v913, %v914
      %v1298 = vadd.f32 %v1297, %v915
      %v1299 = vadd.f32 %v1298, %v916
      %v1300 = vadd.f32 %v1299, %v917
      %v1301 = vadd.f32 %v1300, %v918
      %v1302 = vadd.f32 %v1301, %v919
      %v1303 = vadd.f32 %v1302, %v920
      %v1304 = vadd.f32 %v1303, %v921
      %v1305 = vadd.f32 %v1304, %v922
      %v1306 = vadd.f32 %v1305, %v923
      %v1307 = vadd.f32 %v1306, %v924
      %v1308 = vadd.f32 %v1307, %v925
      %v1309 = vadd.f32 %v1308, %v926
      %v1310 = vadd.f32 %v1309, %v927
      %v1311 = vadd.f32 %v1310, %v928
      %v1312 = vadd.f32 %v1311, %v929
      %v1313 = vadd.f32 %v1312, %v930
      %v1314 = vadd.f32 %v1313, %v931
      %v1315 = vadd.f32 %v1314, %v932
      %v1316 = vadd.f32 %v1315, %v933
      %v1317 = vadd.f32 %v1316, %v934
      %v1318 = vadd.f32 %v1317, %v935
      %v1319 = vadd.f32 %v1318, %v936
      %v1320 = vadd.f32 %v1319, %v937
      %v1321 = vadd.f32 %v1320, %v938
      %v1322 = vadd.f32 %v1321, %v939
      %v1323 = vadd.f32 %v1322, %v940
      %v1324 = vadd.f32 %v1323, %v941
      %v1325 = vadd.f32 %v1324, %v942
      %v1326 = vadd.f32 %v1325, %v943
      %v1327 = vadd.f32 %v1326, %v944
      %v1328 = vadd.f32 %v1327, %v945
      %v1329 = vadd.f32 %v1328, %v946
      %v1330 = vadd.f32 %v1329, %v947
      %v1331 = vadd.f32 %v1330, %v948
      %v1332 = vadd.f32 %v1331, %v949
      %v1333 = vadd.f32 %v1332, %v950
      %v1334 = vadd.f32 %v1333, %v951
      %v1335 = vadd.f32 %v1334, %v952
      %v1336 = vadd.f32 %v1335, %v953
      %v1337 = vadd.f32 %v1336, %v954
      %v1338 = vadd.f32 %v1337, %v955
      %v1339 = vadd.f32 %v1338, %v956
      %v1340 = vadd.f32 %v1339, %v957
      %v1341 = vadd.f32 %v1340, %v958
      %v1342 = vadd.f32 %v1341, %v959
      %v1343 = vadd.f32 %v1342, %v960
      %v1344 = vadd.f32 %v1343, %v961
      %v1345 = vadd.f32 %v1344, %v962
      %v1346 = vadd.f32 %v1345, %v963
      %v1347 = vadd.f32 %v1346, %v964
      %v1348 = vadd.f32 %v1347, %v965
      %v1349 = vadd.f32 %v1348, %v966
      %v1350 = vadd.f32 %v1349, %v967
      %v1351 = vadd.f32 %v1350, %v968
      %v1352 = vadd.f32 %v1351, %v969
      %v1353 = vadd.f32 %v1352, %v970
      %v1354 = vadd.f32 %v1353, %v971
      %v1355 = vadd.f32 %v1354, %v972
      %v1356 = vadd.f32 %v1355, %v973
      %v1357 = vadd.f32 %v1356, %v974
      %v1358 = vadd.f32 %v1357, %v975
      %v1359 = vadd.f32 %v1358, %v976
      %v1360 = vrot.slane %v1359, 4
      %v1361 = vadd.f32 %v1359, %v1360
      %v1362 = vrot.slane %v1361, 2
      %v1363 = vadd.f32 %v1361, %v1362
      %v1364 = vrot.slane %v1363, 1
      %v1365 = vadd.f32 %v1363, %v1364
      %v1366 = vmul.f32 %v913, %v913
      %v1367 = vmul.f32 %v914, %v914
      %v1368 = vmul.f32 %v915, %v915
      %v1369 = vmul.f32 %v916, %v916
      %v1370 = vmul.f32 %v917, %v917
      %v1371 = vmul.f32 %v918, %v918
      %v1372 = vmul.f32 %v919, %v919
      %v1373 = vmul.f32 %v920, %v920
      %v1374 = vmul.f32 %v921, %v921
      %v1375 = vmul.f32 %v922, %v922
      %v1376 = vmul.f32 %v923, %v923
      %v1377 = vmul.f32 %v924, %v924
      %v1378 = vmul.f32 %v925, %v925
      %v1379 = vmul.f32 %v926, %v926
      %v1380 = vmul.f32 %v927, %v927
      %v1381 = vmul.f32 %v928, %v928
      %v1382 = vmul.f32 %v929, %v929
      %v1383 = vmul.f32 %v930, %v930
      %v1384 = vmul.f32 %v931, %v931
      %v1385 = vmul.f32 %v932, %v932
      %v1386 = vmul.f32 %v933, %v933
      %v1387 = vmul.f32 %v934, %v934
      %v1388 = vmul.f32 %v935, %v935
      %v1389 = vmul.f32 %v936, %v936
      %v1390 = vmul.f32 %v937, %v937
      %v1391 = vmul.f32 %v938, %v938
      %v1392 = vmul.f32 %v939, %v939
      %v1393 = vmul.f32 %v940, %v940
      %v1394 = vmul.f32 %v941, %v941
      %v1395 = vmul.f32 %v942, %v942
      %v1396 = vmul.f32 %v943, %v943
      %v1397 = vmul.f32 %v944, %v944
      %v1398 = vmul.f32 %v945, %v945
      %v1399 = vmul.f32 %v946, %v946
      %v1400 = vmul.f32 %v947, %v947
      %v1401 = vmul.f32 %v948, %v948
      %v1402 = vmul.f32 %v949, %v949
      %v1403 = vmul.f32 %v950, %v950
      %v1404 = vmul.f32 %v951, %v951
      %v1405 = vmul.f32 %v952, %v952
      %v1406 = vmul.f32 %v953, %v953
      %v1407 = vmul.f32 %v954, %v954
      %v1408 = vmul.f32 %v955, %v955
      %v1409 = vmul.f32 %v956, %v956
      %v1410 = vmul.f32 %v957, %v957
      %v1411 = vmul.f32 %v958, %v958
      %v1412 = vmul.f32 %v959, %v959
      %v1413 = vmul.f32 %v960, %v960
      %v1414 = vmul.f32 %v961, %v961
      %v1415 = vmul.f32 %v962, %v962
      %v1416 = vmul.f32 %v963, %v963
      %v1417 = vmul.f32 %v964, %v964
      %v1418 = vmul.f32 %v965, %v965
      %v1419 = vmul.f32 %v966, %v966
      %v1420 = vmul.f32 %v967, %v967
      %v1421 = vmul.f32 %v968, %v968
      %v1422 = vmul.f32 %v969, %v969
      %v1423 = vmul.f32 %v970, %v970
      %v1424 = vmul.f32 %v971, %v971
      %v1425 = vmul.f32 %v972, %v972
      %v1426 = vmul.f32 %v973, %v973
      %v1427 = vmul.f32 %v974, %v974
      %v1428 = vmul.f32 %v975, %v975
      %v1429 = vmul.f32 %v976, %v976
      %v1430 = vadd.f32 %v1366, %v1367
      %v1431 = vadd.f32 %v1430, %v1368
      %v1432 = vadd.f32 %v1431, %v1369
      %v1433 = vadd.f32 %v1432, %v1370
      %v1434 = vadd.f32 %v1433, %v1371
      %v1435 = vadd.f32 %v1434, %v1372
      %v1436 = vadd.f32 %v1435, %v1373
      %v1437 = vadd.f32 %v1436, %v1374
      %v1438 = vadd.f32 %v1437, %v1375
      %v1439 = vadd.f32 %v1438, %v1376
      %v1440 = vadd.f32 %v1439, %v1377
      %v1441 = vadd.f32 %v1440, %v1378
      %v1442 = vadd.f32 %v1441, %v1379
      %v1443 = vadd.f32 %v1442, %v1380
      %v1444 = vadd.f32 %v1443, %v1381
      %v1445 = vadd.f32 %v1444, %v1382
      %v1446 = vadd.f32 %v1445, %v1383
      %v1447 = vadd.f32 %v1446, %v1384
      %v1448 = vadd.f32 %v1447, %v1385
      %v1449 = vadd.f32 %v1448, %v1386
      %v1450 = vadd.f32 %v1449, %v1387
      %v1451 = vadd.f32 %v1450, %v1388
      %v1452 = vadd.f32 %v1451, %v1389
      %v1453 = vadd.f32 %v1452, %v1390
      %v1454 = vadd.f32 %v1453, %v1391
      %v1455 = vadd.f32 %v1454, %v1392
      %v1456 = vadd.f32 %v1455, %v1393
      %v1457 = vadd.f32 %v1456, %v1394
      %v1458 = vadd.f32 %v1457, %v1395
      %v1459 = vadd.f32 %v1458, %v1396
      %v1460 = vadd.f32 %v1459, %v1397
      %v1461 = vadd.f32 %v1460, %v1398
      %v1462 = vadd.f32 %v1461, %v1399
      %v1463 = vadd.f32 %v1462, %v1400
      %v1464 = vadd.f32 %v1463, %v1401
      %v1465 = vadd.f32 %v1464, %v1402
      %v1466 = vadd.f32 %v1465, %v1403
      %v1467 = vadd.f32 %v1466, %v1404
      %v1468 = vadd.f32 %v1467, %v1405
      %v1469 = vadd.f32 %v1468, %v1406
      %v1470 = vadd.f32 %v1469, %v1407
      %v1471 = vadd.f32 %v1470, %v1408
      %v1472 = vadd.f32 %v1471, %v1409
      %v1473 = vadd.f32 %v1472, %v1410
      %v1474 = vadd.f32 %v1473, %v1411
      %v1475 = vadd.f32 %v1474, %v1412
      %v1476 = vadd.f32 %v1475, %v1413
      %v1477 = vadd.f32 %v1476, %v1414
      %v1478 = vadd.f32 %v1477, %v1415
      %v1479 = vadd.f32 %v1478, %v1416
      %v1480 = vadd.f32 %v1479, %v1417
      %v1481 = vadd.f32 %v1480, %v1418
      %v1482 = vadd.f32 %v1481, %v1419
      %v1483 = vadd.f32 %v1482, %v1420
      %v1484 = vadd.f32 %v1483, %v1421
      %v1485 = vadd.f32 %v1484, %v1422
      %v1486 = vadd.f32 %v1485, %v1423
      %v1487 = vadd.f32 %v1486, %v1424
      %v1488 = vadd.f32 %v1487, %v1425
      %v1489 = vadd.f32 %v1488, %v1426
      %v1490 = vadd.f32 %v1489, %v1427
      %v1491 = vadd.f32 %v1490, %v1428
      %v1492 = vadd.f32 %v1491, %v1429
      %v1493 = vrot.slane %v1492, 4
      %v1494 = vadd.f32 %v1492, %v1493
      %v1495 = vrot.slane %v1494, 2
      %v1496 = vadd.f32 %v1494, %v1495
      %v1497 = vrot.slane %v1496, 1
      %v1498 = vadd.f32 %v1496, %v1497
      %vm1499 = vcmask 1040384
      %v1500 = vsel %vm1499, %v1365, %v1498
      %1501 = vst [vmem:[#allocation5] sm:$0x3] %v1500
    $region17: #{tpu_custom_call.1} parent=1 // pred_fallthru
      _
    // Predicated region
    $region18: #{tpu_custom_call.1} parent=1 // pred_check
      _
    $region19: #{tpu_custom_call.1} parent=1 // pred_check_branch
      %1503 = sbr.rel (0) target = $region21
    $region20: #{tpu_custom_call.1} parent=1 // pred_region
      %s1505 = ssub.s32 4096, 4096
      %1506 = vsyncadd [#allocation4], %s1505
      %s1507 = sshll.u32 [#allocation3], 4
      %s1508 = int_to_ptr.vmem [resolvable:$true] %s1507
      %1513 = dma.vmem_to_hbm [thread:$0]  %s1508, 4096, %s2, [#allocation4], 64, 64, 4
    $region21: #{tpu_custom_call.1} parent=1 // pred_fallthru
      _
    // Predicated region
    $region22: #{tpu_custom_call.1} parent=1 // pred_check
      _
    $region23: #{tpu_custom_call.1} parent=1 // pred_check_branch
      %1515 = sbr.rel (0) target = $region25
    $region24: #{tpu_custom_call.1} parent=1 // pred_region
      %s1517 = ssub.s32 32, 32
      %1518 = vsyncadd [#allocation6], %s1517
      %s1520 = sshll.u32 [#allocation5], 4
      %s1521 = int_to_ptr.vmem [resolvable:$true] %s1520
      %1523 = dma.vmem_to_hbm [thread:$0]  %s1521, 32, %s3, [#allocation6]
    $region25: #{tpu_custom_call.1} parent=1 // pred_fallthru
      _
    // Predicated region
    $region26: #{tpu_custom_call.1} parent=1 // pred_check
      _
    $region27: #{tpu_custom_call.1} parent=1 // pred_check_branch
      %1525 = sbr.rel (0) target = $region29
    $region28: #{tpu_custom_call.1} parent=1 // pred_region
      %1526 = dma.done [#allocation4], 4096
    $region29: #{tpu_custom_call.1} parent=1 // pred_fallthru
      _
    // Predicated region
    $region30: #{tpu_custom_call.1} parent=1 // pred_check
      _
    $region31: #{tpu_custom_call.1} parent=1 // pred_check_branch
      %1528 = sbr.rel (0) target = $region33
    $region32: #{tpu_custom_call.1} parent=1 // pred_region
      %1529 = dma.done [#allocation6], 32
    $region33: #{tpu_custom_call.1} parent=1 // pred_fallthru
      _
    %1530 = vsyncpa [#allocation4], 1
    %1531 = vsyncpa [#allocation6], 1

</llo_original>
